<compile_context>
chip_gen: v7x
topology: tpu7x:2x2x1
jax: 0.10.0
libtpu: 0.0.40
codegen_flags: <defaults>
</compile_context>

<pallas_src>
import numpy as np
import jax
import jax.numpy as jnp
from jax.experimental import pallas as pl
from jax.experimental.pallas import tpu as pltpu

# Real EfficientNet-b0 feature width is 1280; a small stand-in keeps the
# example tiny (semantics identical, only sizes differ).  256 is used so that
# HALF_IN = 128 is lane-aligned, mirroring the real HALF_IN = 640.
NUM_FEATURES = 256
HALF_IN = NUM_FEATURES // 2      # half_in_size
LAYER_WIDTH = 20                 # layer_width
NUM_CLASSES = 5                  # num_classes
OUT_PAD = 128                    # lane-dense padded output width
BN_EPS = 1e-5
LW = LAYER_WIDTH


def _spinal_kernel(x_ref,       # [TB, NUM_FEATURES] f32
                   wAB_ref,     # [2, HALF_IN, 2*LW] bf16  (0: w1|w3a, 1: w2a|w4a)
                   wchain_ref,  # [3, LW, LW] f32          (w2b, w3b, w4b)
                   wo_ref,      # [4, LW, OUT_PAD] f32     (fc_out split per x_i)
                   vec_ref,     # [8, 128] f32: rows 0-3 shifts, row 4 out bias
                   out_ref):    # [TB, OUT_PAD] bf16
    f32 = jnp.float32
    bf16 = jnp.bfloat16

    x = x_ref[...]
    xA = x[:, 0:HALF_IN].astype(bf16)            # lane-aligned slices (free)
    xB = x[:, HALF_IN:2 * HALF_IN].astype(bf16)

    # Merged matmuls sharing an LHS (xA drives layers 1 & 3a, xB drives 2a & 4a).
    pA = jnp.dot(xA, wAB_ref[0], preferred_element_type=f32)     # [TB, 2*LW]
    pB = jnp.dot(xB, wAB_ref[1], preferred_element_type=f32)     # [TB, 2*LW]

    t1 = vec_ref[0:1, 0:LW]
    t2 = vec_ref[1:2, 0:LW]
    t3 = vec_ref[2:3, 0:LW]
    t4 = vec_ref[3:4, 0:LW]
    bo = vec_ref[4:5, :]                                          # [1, OUT_PAD]

    # BN scale already folded into the weight columns -> shift + ReLU only.
    # The chain dots stay in f32 (tiny K=20) so rounding does not compound.
    x1 = jnp.maximum(pA[:, 0:LW] + t1, 0.0)
    x2 = jnp.maximum(
        pB[:, 0:LW]
        + jnp.dot(x1, wchain_ref[0], preferred_element_type=f32) + t2, 0.0)
    x3 = jnp.maximum(
        pA[:, LW:2 * LW]
        + jnp.dot(x2, wchain_ref[1], preferred_element_type=f32) + t3, 0.0)
    x4 = jnp.maximum(
        pB[:, LW:2 * LW]
        + jnp.dot(x3, wchain_ref[2], preferred_element_type=f32) + t4, 0.0)

    # fc_out(cat([x1, x2, x3, x4])) as four accumulated dots on the live vregs
    # (no VMEM staging / reload).
    out = (jnp.dot(x1, wo_ref[0], preferred_element_type=f32)
           + jnp.dot(x2, wo_ref[1], preferred_element_type=f32)
           + jnp.dot(x3, wo_ref[2], preferred_element_type=f32)
           + jnp.dot(x4, wo_ref[3], preferred_element_type=f32)
           + bo)
    out_ref[...] = out.astype(out_ref.dtype)      # unmasked [TB, 128] bf16 store


def _pick_tb(B, target=256):
    """Largest multiple-of-16 divisor of B up to `target`; keep the grid >= 2
    steps when the batch allows it (so both TensorCores get work on v7x).
    At the real 1280-feature width, raise `target` to 512-1024."""
    assert B % 16 == 0, "batch must be a multiple of 16 (bf16 sublane packing)"
    tb = 16
    t = 16
    while t <= min(B, target):
        if B % t == 0:
            tb = t
        t += 16
    if tb == B and B >= 32:
        half = B // 2
        tb = half if half % 16 == 0 else 16
    return tb


def efficient_spinal_net_pallas(x, ka, *, tb=None):
    """x: [B, NUM_FEATURES] f32 (fed straight to the kernel, cast in VMEM).
    ka: dict from fold_for_kernel()."""
    B = x.shape[0]
    if tb is None:
        tb = _pick_tb(B)
    assert B % tb == 0, "batch must be a multiple of the batch tile"

    # NOTE: if an xprof trace at real size shows exposed DMA between grid
    # steps, add pipeline_mode=pl.Buffered(3) to the x input spec.
    out_padded = pl.pallas_call(
        _spinal_kernel,
        out_shape=jax.ShapeDtypeStruct((B, OUT_PAD), jnp.bfloat16),
        grid=(B // tb,),
        in_specs=[
            pl.BlockSpec((tb, NUM_FEATURES), lambda i: (i, 0)),         # x
            pl.BlockSpec((2, HALF_IN, 2 * LW), lambda i: (0, 0, 0)),    # wAB
            pl.BlockSpec((3, LW, LW), lambda i: (0, 0, 0)),             # wchain
            pl.BlockSpec((4, LW, OUT_PAD), lambda i: (0, 0, 0)),        # wo
            pl.BlockSpec((8, 128), lambda i: (0, 0)),                   # vec slab
        ],
        out_specs=pl.BlockSpec((tb, OUT_PAD), lambda i: (i, 0)),
        compiler_params=pltpu.CompilerParams(
            dimension_semantics=("parallel",),
            # explicit limit so large tiles also fit v5e's 16 MiB default
            vmem_limit_bytes=48 * 1024 * 1024),
    )(x, ka["wAB"], ka["wchain"], ka["wo"], ka["vec"])
    return out_padded[:, :NUM_CLASSES].astype(jnp.float32)


# ----------------------------- parameter setup ------------------------------
def _linear_init(key, out_f, in_f):
    k = 1.0 / np.sqrt(in_f)
    kw, kb = jax.random.split(key)
    w = jax.random.uniform(kw, (out_f, in_f), jnp.float32, -k, k)   # torch layout
    b = jax.random.uniform(kb, (out_f,), jnp.float32, -k, k)
    return w, b


def _bn_init(key, f):
    kg, kb, km, kv = jax.random.split(key, 4)
    gamma = 1.0 + 0.1 * jax.random.normal(kg, (f,), jnp.float32)
    beta = 0.1 * jax.random.normal(kb, (f,), jnp.float32)
    mean = 0.1 * jax.random.normal(km, (f,), jnp.float32)
    var = jnp.abs(jax.random.normal(kv, (f,), jnp.float32)) + 0.5
    return gamma, beta, mean, var


def make_params(key):
    keys = jax.random.split(key, 10)
    p = {}
    p["lin1"] = _linear_init(keys[0], LAYER_WIDTH, HALF_IN)
    p["bn1"] = _bn_init(keys[1], LAYER_WIDTH)
    p["lin2"] = _linear_init(keys[2], LAYER_WIDTH, HALF_IN + LAYER_WIDTH)
    p["bn2"] = _bn_init(keys[3], LAYER_WIDTH)
    p["lin3"] = _linear_init(keys[4], LAYER_WIDTH, HALF_IN + LAYER_WIDTH)
    p["bn3"] = _bn_init(keys[5], LAYER_WIDTH)
    p["lin4"] = _linear_init(keys[6], LAYER_WIDTH, HALF_IN + LAYER_WIDTH)
    p["bn4"] = _bn_init(keys[7], LAYER_WIDTH)
    p["out"] = _linear_init(keys[8], NUM_CLASSES, LAYER_WIDTH * 4)
    return p


def fold_for_kernel(p):
    """Fold eval-mode BN (scale into weight columns, (b-mean)*scale+beta into
    the shift), merge/pack weights into a few padded slabs, cast only the
    large xA/xB matmul weights to bf16."""
    def fold(lin, bn):
        w, b = lin
        gamma, beta, mean, var = bn
        scale = gamma / jnp.sqrt(var + BN_EPS)
        shift = (b - mean) * scale + beta
        w_scaled = w.T * scale[None, :]           # [in, out], BN scale folded in
        return w_scaled, shift

    w1s, t1 = fold(p["lin1"], p["bn1"])           # [HALF_IN, LW]
    w2s, t2 = fold(p["lin2"], p["bn2"])           # [HALF_IN+LW, LW]
    w3s, t3 = fold(p["lin3"], p["bn3"])
    w4s, t4 = fold(p["lin4"], p["bn4"])
    wo = p["out"][0].T                            # [4*LW, NUM_CLASSES]
    bo = p["out"][1]

    wA = jnp.concatenate([w1s, w3s[:HALF_IN]], axis=1)            # [HALF_IN, 2*LW]
    wB = jnp.concatenate([w2s[:HALF_IN], w4s[:HALF_IN]], axis=1)  # [HALF_IN, 2*LW]
    wAB = jnp.stack([wA, wB], axis=0).astype(jnp.bfloat16)        # [2, HALF_IN, 2*LW]

    wchain = jnp.stack([w2s[HALF_IN:], w3s[HALF_IN:], w4s[HALF_IN:]],
                       axis=0).astype(jnp.float32)                # [3, LW, LW]

    wo_pad = jnp.zeros((4, LW, OUT_PAD), jnp.float32)
    for j in range(4):
        wo_pad = wo_pad.at[j, :, :NUM_CLASSES].set(wo[j * LW:(j + 1) * LW])

    vec = jnp.zeros((8, 128), jnp.float32)
    vec = vec.at[0, :LW].set(t1)
    vec = vec.at[1, :LW].set(t2)
    vec = vec.at[2, :LW].set(t3)
    vec = vec.at[3, :LW].set(t4)
    vec = vec.at[4, :NUM_CLASSES].set(bo)

    return dict(wAB=wAB, wchain=wchain, wo=wo_pad, vec=vec)


# --------------------------- pure-JAX reference -----------------------------
def reference_forward(x, p):
    # mirrors the PyTorch forward in eval mode (dropout = identity, BN = eval)
    def block(inp, lin, bn):
        w, b = lin
        gamma, beta, mean, var = bn
        y = inp @ w.T + b
        y = gamma * (y - mean) / jnp.sqrt(var + BN_EPS) + beta
        return jnp.maximum(y, 0.0)

    xA = x[:, 0:HALF_IN]
    xB = x[:, HALF_IN:2 * HALF_IN]
    x1 = block(xA, p["lin1"], p["bn1"])
    x2 = block(jnp.concatenate([xB, x1], axis=1), p["lin2"], p["bn2"])
    x3 = block(jnp.concatenate([xA, x2], axis=1), p["lin3"], p["bn3"])
    x4 = block(jnp.concatenate([xB, x3], axis=1), p["lin4"], p["bn4"])
    cat = jnp.concatenate([x1, x2, x3, x4], axis=1)
    w, b = p["out"]
    return cat @ w.T + b


if __name__ == "__main__":
    # TODO(synk): nn.Dropout has no deterministic Pallas equivalent in training
    # mode; this implements inference-mode (identity) dropout like model.eval().
    key = jax.random.PRNGKey(0)
    kx, kp = jax.random.split(key)

    batch = 128
    x = jax.random.normal(kx, (batch, NUM_FEATURES), jnp.float32)

    params = make_params(kp)
    kernel_args = fold_for_kernel(params)

    out = efficient_spinal_net_pallas(x, kernel_args)   # tb auto: 64, grid=2
    out = jax.block_until_ready(out)

    ref = jax.block_until_ready(reference_forward(x, params))
    assert out.shape == (batch, NUM_CLASSES)
    # bf16 xA/xB matmul inputs + bf16 output store (f32 accumulation and f32
    # chain/output weights) -> modest tolerance vs the f32 reference.
    np.testing.assert_allclose(np.asarray(out), np.asarray(ref),
                               rtol=2e-2, atol=2e-2)
    print("KERNEL_OK")
</pallas_src>

<mosaic_0001>
module attributes {stable_mosaic.version = 11 : i64} {
  func.func @_spinal_kernel(%arg0: i32, %arg1: memref<64x256xf32, #tpu.memory_space<vmem>>, %arg2: memref<2x128x40xbf16, #tpu.memory_space<vmem>>, %arg3: memref<3x20x20xf32, #tpu.memory_space<vmem>>, %arg4: memref<4x20x128xf32, #tpu.memory_space<vmem>>, %arg5: memref<8x128xf32, #tpu.memory_space<vmem>>, %arg6: memref<64x128xbf16, #tpu.memory_space<vmem>>) attributes {dimension_semantics = [#tpu.dimension_semantics<parallel>], iteration_bounds = array<i64: 2>, scalar_prefetch = 0 : i64, scratch_operands = 0 : i64, tpu.core_type = #tpu.core_type<tc>, window_params = [{transform_indices = @transform_0, window_bounds = array<i64: 64, 256>}, {pipeline_mode = #tpu.pipeline_mode<synchronous>, transform_indices = @transform_1, window_bounds = array<i64: 2, 128, 40>}, {pipeline_mode = #tpu.pipeline_mode<synchronous>, transform_indices = @transform_2, window_bounds = array<i64: 3, 20, 20>}, {pipeline_mode = #tpu.pipeline_mode<synchronous>, transform_indices = @transform_3, window_bounds = array<i64: 4, 20, 128>}, {pipeline_mode = #tpu.pipeline_mode<synchronous>, transform_indices = @transform_4, window_bounds = array<i64: 8, 128>}, {transform_indices = @transform_5, window_bounds = array<i64: 64, 128>}]} {
    %c0 = arith.constant 0 : index
    %c0_0 = arith.constant 0 : index
    %0 = vector.load %arg1[%c0, %c0_0] : memref<64x256xf32, #tpu.memory_space<vmem>>, vector<64x256xf32>
    %1 = vector.extract_strided_slice %0 {offsets = [0, 0], sizes = [64, 128], strides = [1, 1]} : vector<64x256xf32> to vector<64x128xf32>
    %2 = arith.truncf %1 : vector<64x128xf32> to vector<64x128xbf16>
    %3 = vector.extract_strided_slice %0 {offsets = [0, 128], sizes = [64, 128], strides = [1, 1]} : vector<64x256xf32> to vector<64x128xf32>
    %4 = arith.truncf %3 : vector<64x128xf32> to vector<64x128xbf16>
    %c0_1 = arith.constant 0 : index
    %c0_2 = arith.constant 0 : index
    %c0_3 = arith.constant 0 : index
    %5 = vector.load %arg2[%c0_1, %c0_2, %c0_3] : memref<2x128x40xbf16, #tpu.memory_space<vmem>>, vector<1x128x40xbf16>
    %6 = vector.shape_cast %5 : vector<1x128x40xbf16> to vector<128x40xbf16>
    %cst = arith.constant dense<0.000000e+00> : vector<64x40xf32>
    %7 = tpu.matmul %2, %6, %cst {dimension_numbers = #tpu.dot_dimension_numbers<[1], [0], [0], [1], [0, 0, 1, 1], [], []>} : vector<64x128xbf16>, vector<128x40xbf16>, vector<64x40xf32> -> vector<64x40xf32>
    %c1 = arith.constant 1 : index
    %c0_4 = arith.constant 0 : index
    %c0_5 = arith.constant 0 : index
    %8 = vector.load %arg2[%c1, %c0_4, %c0_5] : memref<2x128x40xbf16, #tpu.memory_space<vmem>>, vector<1x128x40xbf16>
    %9 = vector.shape_cast %8 : vector<1x128x40xbf16> to vector<128x40xbf16>
    %cst_6 = arith.constant dense<0.000000e+00> : vector<64x40xf32>
    %10 = tpu.matmul %4, %9, %cst_6 {dimension_numbers = #tpu.dot_dimension_numbers<[1], [0], [0], [1], [0, 0, 1, 1], [], []>} : vector<64x128xbf16>, vector<128x40xbf16>, vector<64x40xf32> -> vector<64x40xf32>
    %c0_7 = arith.constant 0 : index
    %c0_8 = arith.constant 0 : index
    %11 = vector.load %arg5[%c0_7, %c0_8] : memref<8x128xf32, #tpu.memory_space<vmem>>, vector<1x20xf32>
    %c1_9 = arith.constant 1 : index
    %c0_10 = arith.constant 0 : index
    %12 = vector.load %arg5[%c1_9, %c0_10] : memref<8x128xf32, #tpu.memory_space<vmem>>, vector<1x20xf32>
    %c2 = arith.constant 2 : index
    %c0_11 = arith.constant 0 : index
    %13 = vector.load %arg5[%c2, %c0_11] : memref<8x128xf32, #tpu.memory_space<vmem>>, vector<1x20xf32>
    %c3 = arith.constant 3 : index
    %c0_12 = arith.constant 0 : index
    %14 = vector.load %arg5[%c3, %c0_12] : memref<8x128xf32, #tpu.memory_space<vmem>>, vector<1x20xf32>
    %c4 = arith.constant 4 : index
    %c0_13 = arith.constant 0 : index
    %15 = vector.load %arg5[%c4, %c0_13] : memref<8x128xf32, #tpu.memory_space<vmem>>, vector<1x128xf32>
    %16 = vector.extract_strided_slice %7 {offsets = [0, 0], sizes = [64, 20], strides = [1, 1]} : vector<64x40xf32> to vector<64x20xf32>
    %17 = vector.broadcast %11 : vector<1x20xf32> to vector<64x20xf32>
    %18 = arith.addf %16, %17 : vector<64x20xf32>
    %cst_14 = arith.constant 0.000000e+00 : f32
    %19 = vector.broadcast %cst_14 : f32 to vector<64x20xf32>
    %20 = arith.maximumf %18, %19 : vector<64x20xf32>
    %21 = vector.extract_strided_slice %10 {offsets = [0, 0], sizes = [64, 20], strides = [1, 1]} : vector<64x40xf32> to vector<64x20xf32>
    %c0_15 = arith.constant 0 : index
    %c0_16 = arith.constant 0 : index
    %c0_17 = arith.constant 0 : index
    %22 = vector.load %arg3[%c0_15, %c0_16, %c0_17] : memref<3x20x20xf32, #tpu.memory_space<vmem>>, vector<1x20x20xf32>
    %23 = vector.shape_cast %22 : vector<1x20x20xf32> to vector<20x20xf32>
    %cst_18 = arith.constant dense<0.000000e+00> : vector<64x20xf32>
    %24 = tpu.matmul %20, %23, %cst_18 {dimension_numbers = #tpu.dot_dimension_numbers<[1], [0], [0], [1], [0, 0, 1, 1], [], []>} : vector<64x20xf32>, vector<20x20xf32>, vector<64x20xf32> -> vector<64x20xf32>
    %25 = arith.addf %21, %24 : vector<64x20xf32>
    %26 = vector.broadcast %12 : vector<1x20xf32> to vector<64x20xf32>
    %27 = arith.addf %25, %26 : vector<64x20xf32>
    %cst_19 = arith.constant 0.000000e+00 : f32
    %28 = vector.broadcast %cst_19 : f32 to vector<64x20xf32>
    %29 = arith.maximumf %27, %28 : vector<64x20xf32>
    %30 = vector.extract_strided_slice %7 {offsets = [0, 20], sizes = [64, 20], strides = [1, 1]} : vector<64x40xf32> to vector<64x20xf32>
    %c1_20 = arith.constant 1 : index
    %c0_21 = arith.constant 0 : index
    %c0_22 = arith.constant 0 : index
    %31 = vector.load %arg3[%c1_20, %c0_21, %c0_22] : memref<3x20x20xf32, #tpu.memory_space<vmem>>, vector<1x20x20xf32>
    %32 = vector.shape_cast %31 : vector<1x20x20xf32> to vector<20x20xf32>
    %cst_23 = arith.constant dense<0.000000e+00> : vector<64x20xf32>
    %33 = tpu.matmul %29, %32, %cst_23 {dimension_numbers = #tpu.dot_dimension_numbers<[1], [0], [0], [1], [0, 0, 1, 1], [], []>} : vector<64x20xf32>, vector<20x20xf32>, vector<64x20xf32> -> vector<64x20xf32>
    %34 = arith.addf %30, %33 : vector<64x20xf32>
    %35 = vector.broadcast %13 : vector<1x20xf32> to vector<64x20xf32>
    %36 = arith.addf %34, %35 : vector<64x20xf32>
    %cst_24 = arith.constant 0.000000e+00 : f32
    %37 = vector.broadcast %cst_24 : f32 to vector<64x20xf32>
    %38 = arith.maximumf %36, %37 : vector<64x20xf32>
    %39 = vector.extract_strided_slice %10 {offsets = [0, 20], sizes = [64, 20], strides = [1, 1]} : vector<64x40xf32> to vector<64x20xf32>
    %c2_25 = arith.constant 2 : index
    %c0_26 = arith.constant 0 : index
    %c0_27 = arith.constant 0 : index
    %40 = vector.load %arg3[%c2_25, %c0_26, %c0_27] : memref<3x20x20xf32, #tpu.memory_space<vmem>>, vector<1x20x20xf32>
    %41 = vector.shape_cast %40 : vector<1x20x20xf32> to vector<20x20xf32>
    %cst_28 = arith.constant dense<0.000000e+00> : vector<64x20xf32>
    %42 = tpu.matmul %38, %41, %cst_28 {dimension_numbers = #tpu.dot_dimension_numbers<[1], [0], [0], [1], [0, 0, 1, 1], [], []>} : vector<64x20xf32>, vector<20x20xf32>, vector<64x20xf32> -> vector<64x20xf32>
    %43 = arith.addf %39, %42 : vector<64x20xf32>
    %44 = vector.broadcast %14 : vector<1x20xf32> to vector<64x20xf32>
    %45 = arith.addf %43, %44 : vector<64x20xf32>
    %cst_29 = arith.constant 0.000000e+00 : f32
    %46 = vector.broadcast %cst_29 : f32 to vector<64x20xf32>
    %47 = arith.maximumf %45, %46 : vector<64x20xf32>
    %c0_30 = arith.constant 0 : index
    %c0_31 = arith.constant 0 : index
    %c0_32 = arith.constant 0 : index
    %48 = vector.load %arg4[%c0_30, %c0_31, %c0_32] : memref<4x20x128xf32, #tpu.memory_space<vmem>>, vector<1x20x128xf32>
    %49 = vector.shape_cast %48 : vector<1x20x128xf32> to vector<20x128xf32>
    %cst_33 = arith.constant dense<0.000000e+00> : vector<64x128xf32>
    %50 = tpu.matmul %20, %49, %cst_33 {dimension_numbers = #tpu.dot_dimension_numbers<[1], [0], [0], [1], [0, 0, 1, 1], [], []>} : vector<64x20xf32>, vector<20x128xf32>, vector<64x128xf32> -> vector<64x128xf32>
    %c1_34 = arith.constant 1 : index
    %c0_35 = arith.constant 0 : index
    %c0_36 = arith.constant 0 : index
    %51 = vector.load %arg4[%c1_34, %c0_35, %c0_36] : memref<4x20x128xf32, #tpu.memory_space<vmem>>, vector<1x20x128xf32>
    %52 = vector.shape_cast %51 : vector<1x20x128xf32> to vector<20x128xf32>
    %cst_37 = arith.constant dense<0.000000e+00> : vector<64x128xf32>
    %53 = tpu.matmul %29, %52, %cst_37 {dimension_numbers = #tpu.dot_dimension_numbers<[1], [0], [0], [1], [0, 0, 1, 1], [], []>} : vector<64x20xf32>, vector<20x128xf32>, vector<64x128xf32> -> vector<64x128xf32>
    %54 = arith.addf %50, %53 : vector<64x128xf32>
    %c2_38 = arith.constant 2 : index
    %c0_39 = arith.constant 0 : index
    %c0_40 = arith.constant 0 : index
    %55 = vector.load %arg4[%c2_38, %c0_39, %c0_40] : memref<4x20x128xf32, #tpu.memory_space<vmem>>, vector<1x20x128xf32>
    %56 = vector.shape_cast %55 : vector<1x20x128xf32> to vector<20x128xf32>
    %cst_41 = arith.constant dense<0.000000e+00> : vector<64x128xf32>
    %57 = tpu.matmul %38, %56, %cst_41 {dimension_numbers = #tpu.dot_dimension_numbers<[1], [0], [0], [1], [0, 0, 1, 1], [], []>} : vector<64x20xf32>, vector<20x128xf32>, vector<64x128xf32> -> vector<64x128xf32>
    %58 = arith.addf %54, %57 : vector<64x128xf32>
    %c3_42 = arith.constant 3 : index
    %c0_43 = arith.constant 0 : index
    %c0_44 = arith.constant 0 : index
    %59 = vector.load %arg4[%c3_42, %c0_43, %c0_44] : memref<4x20x128xf32, #tpu.memory_space<vmem>>, vector<1x20x128xf32>
    %60 = vector.shape_cast %59 : vector<1x20x128xf32> to vector<20x128xf32>
    %cst_45 = arith.constant dense<0.000000e+00> : vector<64x128xf32>
    %61 = tpu.matmul %47, %60, %cst_45 {dimension_numbers = #tpu.dot_dimension_numbers<[1], [0], [0], [1], [0, 0, 1, 1], [], []>} : vector<64x20xf32>, vector<20x128xf32>, vector<64x128xf32> -> vector<64x128xf32>
    %62 = arith.addf %58, %61 : vector<64x128xf32>
    %63 = vector.broadcast %15 : vector<1x128xf32> to vector<64x128xf32>
    %64 = arith.addf %62, %63 : vector<64x128xf32>
    %65 = arith.truncf %64 : vector<64x128xf32> to vector<64x128xbf16>
    %c0_46 = arith.constant 0 : index
    %c0_47 = arith.constant 0 : index
    %66 = vector.load %arg6[%c0_46, %c0_47] : memref<64x128xbf16, #tpu.memory_space<vmem>>, vector<64x128xbf16>
    tpu.vector_store %arg6[%c0_46, %c0_47], %65 {strides = array<i32>} : memref<64x128xbf16, #tpu.memory_space<vmem>>, vector<64x128xbf16>,
    return
  }
  func.func @transform_0(%arg0: i32) -> (i32, i32) {
    %c0_i32 = arith.constant 0 : i32
    %c0_i32_0 = arith.constant 0 : i32
    return %arg0, %c0_i32 : i32, i32
  }
  func.func @transform_1(%arg0: i32) -> (i32, i32, i32) {
    %c0_i32 = arith.constant 0 : i32
    %c0_i32_0 = arith.constant 0 : i32
    %c0_i32_1 = arith.constant 0 : i32
    %c0_i32_2 = arith.constant 0 : i32
    return %c0_i32, %c0_i32_0, %c0_i32_1 : i32, i32, i32
  }
  func.func @transform_2(%arg0: i32) -> (i32, i32, i32) {
    %c0_i32 = arith.constant 0 : i32
    %c0_i32_0 = arith.constant 0 : i32
    %c0_i32_1 = arith.constant 0 : i32
    %c0_i32_2 = arith.constant 0 : i32
    return %c0_i32, %c0_i32_0, %c0_i32_1 : i32, i32, i32
  }
  func.func @transform_3(%arg0: i32) -> (i32, i32, i32) {
    %c0_i32 = arith.constant 0 : i32
    %c0_i32_0 = arith.constant 0 : i32
    %c0_i32_1 = arith.constant 0 : i32
    %c0_i32_2 = arith.constant 0 : i32
    return %c0_i32, %c0_i32_0, %c0_i32_1 : i32, i32, i32
  }
  func.func @transform_4(%arg0: i32) -> (i32, i32) {
    %c0_i32 = arith.constant 0 : i32
    %c0_i32_0 = arith.constant 0 : i32
    %c0_i32_1 = arith.constant 0 : i32
    return %c0_i32, %c0_i32_0 : i32, i32
  }
  func.func @transform_5(%arg0: i32) -> (i32, i32) {
    %c0_i32 = arith.constant 0 : i32
    %c0_i32_0 = arith.constant 0 : i32
    return %arg0, %c0_i32 : i32, i32
  }
}

</mosaic_0001>

<llo_original>
// kernel: tpu_custom_call.1
$region0: #{tpu_custom_call.1}
  #allocation0 [shape = 'u32[]', space=smem, size = 0x4, offset = 0x4, fixed_abs, tag = 'smem constant byte address 0x4 - core index']
  #allocation1 [shape = 'u32[144,128]{1,0:T(1,128)}', space=vmem, size = 0x12000, scoped, tag = 'internal scratch']
  %s0 = inlined_call_operand.vmem [shape: f32[128,256], index: 0, kind: input, shape index: {}]
  %s1 = inlined_call_operand.vmem [shape: bf16[2,128,40], index: 1, kind: input, shape index: {}]
  %s2 = inlined_call_operand.vmem [shape: f32[3,20,20], index: 2, kind: input, shape index: {}]
  %s3 = inlined_call_operand.vmem [shape: f32[4,20,128], index: 3, kind: input, shape index: {}]
  %s4 = inlined_call_operand.vmem [shape: f32[8,128], index: 4, kind: input, shape index: {}]
  %s5 = inlined_call_operand.hbm [shape: bf16[128,128], index: 5, kind: output, shape index: {}]
  %s6 = sld [smem:[#allocation0]]
  $region53: #{tpu_custom_call.1} parent=0
    _
  %s8 = ssub.s32 1, %s6
  %s9 = scalar_select 0, %s8, %s6
  $region1: #{tpu_custom_call.1} parent=0
    #allocation2 [shape = 'u8[32768]{0}', space=vmem, size = 0x8000, scoped, tag = 'output window, operand 0']
    #allocation3 [shape = 's32[2]{0}', space=sflag, size = 0x8, scoped, tag = 'scoped memory for tpu_custom_call.1']
    %10 = vsyncpa [#allocation3], 0
    %s11 = scalar_lea.sflag [#allocation3], 1
    %12 = vsyncpa %s11, 0
    loop: start=0, step=1, limit=4
    $region2: #{tpu_custom_call.1} parent=1 // loop_pre_header
      _
    $region3: #{tpu_custom_call.1} parent=1 // loop_header
      %s14 = sphi 0, %s18
      %p15 = scmp.ge.s32.totalorder %s14, 4
      %s24 = sphi 0, %s26
      %s27 = sphi 0, %s24
      %s28 = sphi 0, %s27
      %s44 = sphi 0, %s28
      %s48 = sphi 0, %s48
      %s50 = sphi 0, %s48
      %s51 = sphi 0, %s50
      %s65 = sphi 0, %s51
      %s69 = sphi 0, %s69
      %s71 = sphi 0, %s69
      %s72 = sphi 0, %s71
      %s86 = sphi 0, %s72
      %s90 = sphi 0, %s90
      %s92 = sphi 0, %s90
      %s93 = sphi 0, %s92
      %s107 = sphi 0, %s93
      %s111 = sphi 0, %s111
      %s113 = sphi 0, %s111
      %s114 = sphi 0, %s113
      %s128 = sphi 0, %s114
      %s134 = sphi 0, %s136
      %s137 = sphi 0, %s134
      %s138 = sphi 0, %s137
      %s154 = sphi 0, %s138
    $region4: #{tpu_custom_call.1} parent=1 // loop_header_branch
      %17 = sbr.rel (%p15) target = $region8
    $region5: #{tpu_custom_call.1} parent=1 // loop_body
      %s19 = ssub.s32 %s14, 1
      %s20 = ssub.s32 %s14, 2
      %s21 = sadd.s32 %s14, 1
      %s22 = ssub.s32 %s14, %s21
      %p23 = scmp.eq.s32.totalorder %s22, 0
      %s25 = sadd.s32 %s24, 1
      %s26 = scalar_select %p23, %s24, %s25
      %p29 = pneg %p23
      %p30 = scmp.eq.s32.totalorder %s14, 1
      %p31 = por %p29, %p30
      %p32 = scmp.ne.s32.totalorder %s24, %s27
      %p33 = scmp.eq.s32.totalorder %s14, 0
      %p34 = por %p32, %p33
      %p35 = scmp.ne.s32.totalorder %s24, %s27
      %p36 = scmp.eq.s32.totalorder %s19, 1
      %p37 = por %p35, %p36
      %p38 = scmp.ne.s32.totalorder %s27, %s28
      %p39 = scmp.eq.s32.totalorder %s19, 0
      %p40 = por %p38, %p39
      %p41 = scmp.ne.s32.totalorder %s27, %s28
      %p42 = scmp.eq.s32.totalorder %s20, 1
      %p43 = por %p41, %p42
      %p45 = scmp.ne.s32.totalorder %s28, %s44
      %p46 = scmp.eq.s32.totalorder %s20, 0
      %p47 = por %p45, %p46
      %s49 = sadd.s32 %s48, 1
      %p52 = scmp.eq.s32.totalorder %s14, 1
      %p53 = scmp.ne.s32.totalorder %s48, %s50
      %p54 = scmp.eq.s32.totalorder %s14, 0
      %p55 = por %p53, %p54
      %p56 = scmp.ne.s32.totalorder %s48, %s50
      %p57 = scmp.eq.s32.totalorder %s19, 1
      %p58 = por %p56, %p57
      %p59 = scmp.ne.s32.totalorder %s50, %s51
      %p60 = scmp.eq.s32.totalorder %s19, 0
      %p61 = por %p59, %p60
      %p62 = scmp.ne.s32.totalorder %s50, %s51
      %p63 = scmp.eq.s32.totalorder %s20, 1
      %p64 = por %p62, %p63
      %p66 = scmp.ne.s32.totalorder %s51, %s65
      %p67 = scmp.eq.s32.totalorder %s20, 0
      %p68 = por %p66, %p67
      %s70 = sadd.s32 %s69, 1
      %p73 = scmp.eq.s32.totalorder %s14, 1
      %p74 = scmp.ne.s32.totalorder %s69, %s71
      %p75 = scmp.eq.s32.totalorder %s14, 0
      %p76 = por %p74, %p75
      %p77 = scmp.ne.s32.totalorder %s69, %s71
      %p78 = scmp.eq.s32.totalorder %s19, 1
      %p79 = por %p77, %p78
      %p80 = scmp.ne.s32.totalorder %s71, %s72
      %p81 = scmp.eq.s32.totalorder %s19, 0
      %p82 = por %p80, %p81
      %p83 = scmp.ne.s32.totalorder %s71, %s72
      %p84 = scmp.eq.s32.totalorder %s20, 1
      %p85 = por %p83, %p84
      %p87 = scmp.ne.s32.totalorder %s72, %s86
      %p88 = scmp.eq.s32.totalorder %s20, 0
      %p89 = por %p87, %p88
      %s91 = sadd.s32 %s90, 1
      %p94 = scmp.eq.s32.totalorder %s14, 1
      %p95 = scmp.ne.s32.totalorder %s90, %s92
      %p96 = scmp.eq.s32.totalorder %s14, 0
      %p97 = por %p95, %p96
      %p98 = scmp.ne.s32.totalorder %s90, %s92
      %p99 = scmp.eq.s32.totalorder %s19, 1
      %p100 = por %p98, %p99
      %p101 = scmp.ne.s32.totalorder %s92, %s93
      %p102 = scmp.eq.s32.totalorder %s19, 0
      %p103 = por %p101, %p102
      %p104 = scmp.ne.s32.totalorder %s92, %s93
      %p105 = scmp.eq.s32.totalorder %s20, 1
      %p106 = por %p104, %p105
      %p108 = scmp.ne.s32.totalorder %s93, %s107
      %p109 = scmp.eq.s32.totalorder %s20, 0
      %p110 = por %p108, %p109
      %s112 = sadd.s32 %s111, 1
      %p115 = scmp.eq.s32.totalorder %s14, 1
      %p116 = scmp.ne.s32.totalorder %s111, %s113
      %p117 = scmp.eq.s32.totalorder %s14, 0
      %p118 = por %p116, %p117
      %p119 = scmp.ne.s32.totalorder %s111, %s113
      %p120 = scmp.eq.s32.totalorder %s19, 1
      %p121 = por %p119, %p120
      %p122 = scmp.ne.s32.totalorder %s113, %s114
      %p123 = scmp.eq.s32.totalorder %s19, 0
      %p124 = por %p122, %p123
      %p125 = scmp.ne.s32.totalorder %s113, %s114
      %p126 = scmp.eq.s32.totalorder %s20, 1
      %p127 = por %p125, %p126
      %p129 = scmp.ne.s32.totalorder %s114, %s128
      %p130 = scmp.eq.s32.totalorder %s20, 0
      %p131 = por %p129, %p130
      %s132 = ssub.s32 %s14, %s21
      %p133 = scmp.eq.s32.totalorder %s132, 0
      %s135 = sadd.s32 %s134, 1
      %s136 = scalar_select %p133, %s134, %s135
      %p139 = pneg %p133
      %p140 = scmp.eq.s32.totalorder %s14, 1
      %p141 = por %p139, %p140
      %p142 = scmp.ne.s32.totalorder %s134, %s137
      %p143 = scmp.eq.s32.totalorder %s14, 0
      %p144 = por %p142, %p143
      %p145 = scmp.ne.s32.totalorder %s134, %s137
      %p146 = scmp.eq.s32.totalorder %s19, 1
      %p147 = por %p145, %p146
      %p148 = scmp.ne.s32.totalorder %s137, %s138
      %p149 = scmp.eq.s32.totalorder %s19, 0
      %p150 = por %p148, %p149
      %p151 = scmp.ne.s32.totalorder %s137, %s138
      %p152 = scmp.eq.s32.totalorder %s20, 1
      %p153 = por %p151, %p152
      %p155 = scmp.ne.s32.totalorder %s138, %s154
      %p156 = scmp.eq.s32.totalorder %s20, 0
      %p157 = por %p155, %p156
      %p158 = scmp.le.s32.totalorder 1, %s14
      %p159 = scmp.lt.s32.totalorder %s14, 3
      %p160 = pnand %p158, %p159
      %p161 = pneg %p160
      // Predicated region
      $region9: #{tpu_custom_call.1} parent=5 // pred_check
        _
      $region10: #{tpu_custom_call.1} parent=5 // pred_check_branch
        %163 = sbr.rel (%p160) target = $region12
      $region11: #{tpu_custom_call.1} parent=5 // pred_region
        %s164 = ssub.s32 %s14, 1
        // Predicated region
        $region13: #{tpu_custom_call.1} parent=11 // pred_check
          %p165 = pneg %p61
        $region14: #{tpu_custom_call.1} parent=11 // pred_check_branch
          %167 = sbr.rel (%p165) target = $region16
        $region15: #{tpu_custom_call.1} parent=11 // pred_region
          _
        $region16: #{tpu_custom_call.1} parent=11 // pred_fallthru
          _
        // Predicated region
        $region17: #{tpu_custom_call.1} parent=11 // pred_check
          %p168 = pneg %p82
        $region18: #{tpu_custom_call.1} parent=11 // pred_check_branch
          %170 = sbr.rel (%p168) target = $region20
        $region19: #{tpu_custom_call.1} parent=11 // pred_region
          _
        $region20: #{tpu_custom_call.1} parent=11 // pred_fallthru
          _
        // Predicated region
        $region21: #{tpu_custom_call.1} parent=11 // pred_check
          %p171 = pneg %p103
        $region22: #{tpu_custom_call.1} parent=11 // pred_check_branch
          %173 = sbr.rel (%p171) target = $region24
        $region23: #{tpu_custom_call.1} parent=11 // pred_region
          _
        $region24: #{tpu_custom_call.1} parent=11 // pred_fallthru
          _
        // Predicated region
        $region25: #{tpu_custom_call.1} parent=11 // pred_check
          %p174 = pneg %p124
        $region26: #{tpu_custom_call.1} parent=11 // pred_check_branch
          %176 = sbr.rel (%p174) target = $region28
        $region27: #{tpu_custom_call.1} parent=11 // pred_region
          _
        $region28: #{tpu_custom_call.1} parent=11 // pred_fallthru
          _
      $region12: #{tpu_custom_call.1} parent=5 // pred_fallthru
        _
      %p177 = scmp.lt.s32.totalorder %s14, 2
      // Predicated region
      $region29: #{tpu_custom_call.1} parent=5 // pred_check
        %p178 = pneg %p177
      $region30: #{tpu_custom_call.1} parent=5 // pred_check_branch
        %180 = sbr.rel (%p178) target = $region32
      $region31: #{tpu_custom_call.1} parent=5 // pred_region
        // Predicated region
        $region33: #{tpu_custom_call.1} parent=31 // pred_check
          %p181 = pneg %p34
        $region34: #{tpu_custom_call.1} parent=31 // pred_check_branch
          %183 = sbr.rel (%p181) target = $region36
        $region35: #{tpu_custom_call.1} parent=31 // pred_region
          %s184 = smul.u32 8, %s14
          %p185 = scmp.lt.s32.totalorder %s184, 15
          %s186 = scalar_select %p185, %s184, 15
          %s187 = smul.addr %s186, 2
          %s188 = smul.addr %s187, 8
          %s189 = scalar_lea.vmem %s0, %s188
          %s190 = smul.u32 8, %s14
        $region36: #{tpu_custom_call.1} parent=31 // pred_fallthru
          _
      $region32: #{tpu_custom_call.1} parent=5 // pred_fallthru
        _
      %p191 = scmp.le.s32.totalorder 1, %s14
      %p192 = scmp.lt.s32.totalorder %s14, 3
      %p193 = pnand %p191, %p192
      %p194 = pneg %p193
      // Predicated region
      $region37: #{tpu_custom_call.1} parent=5 // pred_check
        _
      $region38: #{tpu_custom_call.1} parent=5 // pred_check_branch
        %196 = sbr.rel (%p193) target = $region40
      $region39: #{tpu_custom_call.1} parent=5 // pred_region
        %s197 = ssub.s32 %s14, 1
        %s198 = smul.u32 8, %s19
        %p199 = scmp.lt.s32.totalorder %s198, 15
        %s200 = scalar_select %p199, %s198, 15
        %s201 = smul.addr %s200, 2
        %s202 = smul.addr %s201, 8
        %s203 = scalar_lea.vmem %s0, %s202
        %p204 = pneg %p40
        %p205 = pneg %p37
        %p206 = pneg %p61
        %p207 = pneg %p58
        %p208 = pneg %p82
        %p209 = pneg %p79
        %p210 = pneg %p103
        %p211 = pneg %p100
        %p212 = pneg %p124
        %p213 = pneg %p121
        %p214 = pneg %p150
        %p215 = pneg %p147
        %s216 = sand.u32 %s137, 1
        %s217 = scalar_lea.sflag [#allocation3], %s216
        %s218 = sand.u32 %s137, 1
        %s219 = smul.addr %s218, 32
        %s220 = scalar_lea.vmem [#allocation2], %s219
        %s221 = smul.u32 8, %s19
        %p222 = scmp.lt.s32.totalorder %s221, 15
        %s223 = scalar_select %p222, %s221, 15
        %s224 = smul.addr %s223, 2
        %s225 = smul.addr %s224, 8
        %s226 = scalar_lea.vmem %s0, %s225
        %s227 = smul.u32 8, %s19
        %s228 = smul.u32 8, %s19
        %v230 = vld [vmem:[%s226] sm:$0xff]
        %v231 = vld [vmem:[%s226 + $0x8] sm:$0xff]
        %v232 = vld [vmem:[%s226 + $0x10] sm:$0xff]
        %v233 = vld [vmem:[%s226 + $0x18] sm:$0xff]
        %v234 = vld [vmem:[%s226 + $0x20] sm:$0xff]
        %v235 = vld [vmem:[%s226 + $0x28] sm:$0xff]
        %v236 = vld [vmem:[%s226 + $0x30] sm:$0xff]
        %v237 = vld [vmem:[%s226 + $0x38] sm:$0xff]
        %v238 = vld [vmem:[%s226 + $0x40] sm:$0xff]
        %v239 = vld [vmem:[%s226 + $0x48] sm:$0xff]
        %v240 = vld [vmem:[%s226 + $0x50] sm:$0xff]
        %v241 = vld [vmem:[%s226 + $0x58] sm:$0xff]
        %v242 = vld [vmem:[%s226 + $0x60] sm:$0xff]
        %v243 = vld [vmem:[%s226 + $0x68] sm:$0xff]
        %v244 = vld [vmem:[%s226 + $0x70] sm:$0xff]
        %v245 = vld [vmem:[%s226 + $0x78] sm:$0xff]
        %v246 = vpack.c.bf16 %v232, %v230
        %v247 = vpack.c.bf16 %v236, %v234
        %v248 = vpack.c.bf16 %v240, %v238
        %v249 = vpack.c.bf16 %v244, %v242
        %v250 = vpack.c.bf16 %v233, %v231
        %v251 = vpack.c.bf16 %v237, %v235
        %v252 = vpack.c.bf16 %v241, %v239
        %v253 = vpack.c.bf16 %v245, %v243
        %v254 = vld [vmem:[%s1] sm:$0xf]
        %v255 = vld [vmem:[%s1 + $0x4] sm:$0xf]
        %v256 = vld [vmem:[%s1 + $0x8] sm:$0xf]
        %v257 = vld [vmem:[%s1 + $0xc] sm:$0xf]
        %v258 = vld [vmem:[%s1 + $0x10] sm:$0xf]
        %v259 = vld [vmem:[%s1 + $0x14] sm:$0xf]
        %v260 = vld [vmem:[%s1 + $0x18] sm:$0xf]
        %v261 = vld [vmem:[%s1 + $0x1c] sm:$0xf]
        %v262 = vld [vmem:[%s1 + $0x20] sm:$0xf]
        %v263 = vld [vmem:[%s1 + $0x24] sm:$0xf]
        %v264 = vld [vmem:[%s1 + $0x28] sm:$0xf]
        %v265 = vld [vmem:[%s1 + $0x2c] sm:$0xf]
        %v266 = vld [vmem:[%s1 + $0x30] sm:$0xf]
        %v267 = vld [vmem:[%s1 + $0x34] sm:$0xf]
        %v268 = vld [vmem:[%s1 + $0x38] sm:$0xf]
        %v269 = vld [vmem:[%s1 + $0x3c] sm:$0xf]
        %v286 = vunpack.c.l.b16 %v254
        %v287 = vunpack.c.l.b16 %v255
        %v288 = vunpack.c.l.b16 %v256
        %v289 = vunpack.c.l.b16 %v257
        %v290 = vunpack.c.l.b16 %v258
        %v291 = vunpack.c.l.b16 %v259
        %v292 = vunpack.c.l.b16 %v260
        %v293 = vunpack.c.l.b16 %v261
        %v294 = vunpack.c.l.b16 %v262
        %v295 = vunpack.c.l.b16 %v263
        %v296 = vunpack.c.l.b16 %v264
        %v297 = vunpack.c.l.b16 %v265
        %v298 = vunpack.c.l.b16 %v266
        %v299 = vunpack.c.l.b16 %v267
        %v300 = vunpack.c.l.b16 %v268
        %v301 = vunpack.c.l.b16 %v269
        %v302 = vpack.c.b16 %v287, %v286
        %v303 = vpack.c.b16 %v289, %v288
        %v304 = vpack.c.b16 %v291, %v290
        %v305 = vpack.c.b16 %v293, %v292
        %v306 = vpack.c.b16 %v295, %v294
        %v307 = vpack.c.b16 %v297, %v296
        %v308 = vpack.c.b16 %v299, %v298
        %v309 = vpack.c.b16 %v301, %v300
        %318 = vmatprep.subr.bf16.mxu0 0
        %319 = vmatpush1.bf16.msra.mxu0 %v302
        %320 = vmatprep.subr.bf16.mxu0 0
        %321 = vmatpush1.bf16.msra.mxu0 %v303
        %322 = vmatprep.subr.bf16.mxu0 0
        %323 = vmatpush1.bf16.msra.mxu0 %v304
        %324 = vmatprep.subr.bf16.mxu0 0
        %325 = vmatpush1.bf16.msra.mxu0 %v305
        %326 = vmatprep.subr.bf16.mxu0 0
        %327 = vmatpush1.bf16.msra.mxu0 %v306
        %328 = vmatprep.subr.bf16.mxu0 0
        %329 = vmatpush1.bf16.msra.mxu0 %v307
        %330 = vmatprep.subr.bf16.mxu0 0
        %331 = vmatpush1.bf16.msra.mxu0 %v308
        %332 = vmatprep.subr.bf16.mxu0 0
        %333 = vmatpush1.bf16.msra.mxu0 %v309
        %334 = vmatprep.subr.bf16.mxu0 0
        %335 = vmatpush1.bf16.msra.mxu0 0
        %336 = vmatprep.subr.bf16.mxu0 0
        %337 = vmatpush1.bf16.msra.mxu0 0
        %338 = vmatprep.subr.bf16.mxu0 0
        %339 = vmatpush1.bf16.msra.mxu0 0
        %340 = vmatprep.subr.bf16.mxu0 0
        %341 = vmatpush1.bf16.msra.mxu0 0
        %342 = vmatprep.subr.bf16.mxu0 0
        %343 = vmatpush1.bf16.msra.mxu0 0
        %344 = vmatprep.subr.bf16.mxu0 0
        %345 = vmatpush1.bf16.msra.mxu0 0
        %346 = vmatprep.subr.bf16.mxu0 0
        %347 = vmatpush1.bf16.msra.mxu0 0
        %348 = vmatprep.subr.bf16.mxu0 0
        %349 = vmatpush1.bf16.msra.mxu0 0
        %350 = vmatprep.mubr.bf16.mxu0 0
        %351 = vmatmul.mubr.bf16.gmra.mrb[0].mxu0 %v246
        %v352 = vpop.f32.mrb[0].mxu0
        %v353 = vadd.f32 0.0, %v352
        %v354 = vpop.f32.mrb[0].mxu0
        %v355 = vpop.f32.mrb[0].mxu0
        %v356 = vadd.f32 0.0, %v355
        %v357 = vpop.f32.mrb[0].mxu0
        %358 = vmatprep.mubr.bf16.mxu0 0
        %359 = vmatmul.mubr.bf16.gmra.mrb[0].mxu0 %v247
        %v360 = vpop.f32.mrb[0].mxu0
        %v361 = vadd.f32 0.0, %v360
        %v362 = vpop.f32.mrb[0].mxu0
        %v363 = vpop.f32.mrb[0].mxu0
        %v364 = vadd.f32 0.0, %v363
        %v365 = vpop.f32.mrb[0].mxu0
        %366 = vmatprep.mubr.bf16.mxu0 0
        %367 = vmatmul.mubr.bf16.gmra.mrb[0].mxu0 %v248
        %v368 = vpop.f32.mrb[0].mxu0
        %v369 = vadd.f32 0.0, %v368
        %v370 = vpop.f32.mrb[0].mxu0
        %v371 = vpop.f32.mrb[0].mxu0
        %v372 = vadd.f32 0.0, %v371
        %v373 = vpop.f32.mrb[0].mxu0
        %374 = vmatprep.mubr.bf16.mxu0 0
        %375 = vmatmul.mubr.bf16.gmra.mrb[0].mxu0 %v249
        %v376 = vpop.f32.mrb[0].mxu0
        %v377 = vadd.f32 0.0, %v376
        %v378 = vpop.f32.mrb[0].mxu0
        %v379 = vpop.f32.mrb[0].mxu0
        %v380 = vadd.f32 0.0, %v379
        %v381 = vpop.f32.mrb[0].mxu0
        %382 = vdwg.mxu0
        %s383 = scalar_lea.vmem %s1, 64
        %v384 = vld [vmem:[%s383] sm:$0xf]
        %v385 = vld [vmem:[%s383 + $0x4] sm:$0xf]
        %v386 = vld [vmem:[%s383 + $0x8] sm:$0xf]
        %v387 = vld [vmem:[%s383 + $0xc] sm:$0xf]
        %v388 = vld [vmem:[%s383 + $0x10] sm:$0xf]
        %v389 = vld [vmem:[%s383 + $0x14] sm:$0xf]
        %v390 = vld [vmem:[%s383 + $0x18] sm:$0xf]
        %v391 = vld [vmem:[%s383 + $0x1c] sm:$0xf]
        %v392 = vld [vmem:[%s383 + $0x20] sm:$0xf]
        %v393 = vld [vmem:[%s383 + $0x24] sm:$0xf]
        %v394 = vld [vmem:[%s383 + $0x28] sm:$0xf]
        %v395 = vld [vmem:[%s383 + $0x2c] sm:$0xf]
        %v396 = vld [vmem:[%s383 + $0x30] sm:$0xf]
        %v397 = vld [vmem:[%s383 + $0x34] sm:$0xf]
        %v398 = vld [vmem:[%s383 + $0x38] sm:$0xf]
        %v399 = vld [vmem:[%s383 + $0x3c] sm:$0xf]
        %v416 = vunpack.c.l.b16 %v384
        %v417 = vunpack.c.l.b16 %v385
        %v418 = vunpack.c.l.b16 %v386
        %v419 = vunpack.c.l.b16 %v387
        %v420 = vunpack.c.l.b16 %v388
        %v421 = vunpack.c.l.b16 %v389
        %v422 = vunpack.c.l.b16 %v390
        %v423 = vunpack.c.l.b16 %v391
        %v424 = vunpack.c.l.b16 %v392
        %v425 = vunpack.c.l.b16 %v393
        %v426 = vunpack.c.l.b16 %v394
        %v427 = vunpack.c.l.b16 %v395
        %v428 = vunpack.c.l.b16 %v396
        %v429 = vunpack.c.l.b16 %v397
        %v430 = vunpack.c.l.b16 %v398
        %v431 = vunpack.c.l.b16 %v399
        %v432 = vpack.c.b16 %v417, %v416
        %v433 = vpack.c.b16 %v419, %v418
        %v434 = vpack.c.b16 %v421, %v420
        %v435 = vpack.c.b16 %v423, %v422
        %v436 = vpack.c.b16 %v425, %v424
        %v437 = vpack.c.b16 %v427, %v426
        %v438 = vpack.c.b16 %v429, %v428
        %v439 = vpack.c.b16 %v431, %v430
        %448 = vmatprep.subr.bf16.mxu0 0
        %449 = vmatpush1.bf16.msra.mxu0 %v432
        %450 = vmatprep.subr.bf16.mxu0 0
        %451 = vmatpush1.bf16.msra.mxu0 %v433
        %452 = vmatprep.subr.bf16.mxu0 0
        %453 = vmatpush1.bf16.msra.mxu0 %v434
        %454 = vmatprep.subr.bf16.mxu0 0
        %455 = vmatpush1.bf16.msra.mxu0 %v435
        %456 = vmatprep.subr.bf16.mxu0 0
        %457 = vmatpush1.bf16.msra.mxu0 %v436
        %458 = vmatprep.subr.bf16.mxu0 0
        %459 = vmatpush1.bf16.msra.mxu0 %v437
        %460 = vmatprep.subr.bf16.mxu0 0
        %461 = vmatpush1.bf16.msra.mxu0 %v438
        %462 = vmatprep.subr.bf16.mxu0 0
        %463 = vmatpush1.bf16.msra.mxu0 %v439
        %464 = vmatprep.subr.bf16.mxu0 0
        %465 = vmatpush1.bf16.msra.mxu0 0
        %466 = vmatprep.subr.bf16.mxu0 0
        %467 = vmatpush1.bf16.msra.mxu0 0
        %468 = vmatprep.subr.bf16.mxu0 0
        %469 = vmatpush1.bf16.msra.mxu0 0
        %470 = vmatprep.subr.bf16.mxu0 0
        %471 = vmatpush1.bf16.msra.mxu0 0
        %472 = vmatprep.subr.bf16.mxu0 0
        %473 = vmatpush1.bf16.msra.mxu0 0
        %474 = vmatprep.subr.bf16.mxu0 0
        %475 = vmatpush1.bf16.msra.mxu0 0
        %476 = vmatprep.subr.bf16.mxu0 0
        %477 = vmatpush1.bf16.msra.mxu0 0
        %478 = vmatprep.subr.bf16.mxu0 0
        %479 = vmatpush1.bf16.msra.mxu0 0
        %480 = vmatprep.mubr.bf16.mxu0 0
        %481 = vmatmul.mubr.bf16.gmra.mrb[0].mxu0 %v250
        %v482 = vpop.f32.mrb[0].mxu0
        %v483 = vadd.f32 0.0, %v482
        %v484 = vpop.f32.mrb[0].mxu0
        %v485 = vpop.f32.mrb[0].mxu0
        %v486 = vadd.f32 0.0, %v485
        %v487 = vpop.f32.mrb[0].mxu0
        %488 = vmatprep.mubr.bf16.mxu0 0
        %489 = vmatmul.mubr.bf16.gmra.mrb[0].mxu0 %v251
        %v490 = vpop.f32.mrb[0].mxu0
        %v491 = vadd.f32 0.0, %v490
        %v492 = vpop.f32.mrb[0].mxu0
        %v493 = vpop.f32.mrb[0].mxu0
        %v494 = vadd.f32 0.0, %v493
        %v495 = vpop.f32.mrb[0].mxu0
        %496 = vmatprep.mubr.bf16.mxu0 0
        %497 = vmatmul.mubr.bf16.gmra.mrb[0].mxu0 %v252
        %v498 = vpop.f32.mrb[0].mxu0
        %v499 = vadd.f32 0.0, %v498
        %v500 = vpop.f32.mrb[0].mxu0
        %v501 = vpop.f32.mrb[0].mxu0
        %v502 = vadd.f32 0.0, %v501
        %v503 = vpop.f32.mrb[0].mxu0
        %504 = vmatprep.mubr.bf16.mxu0 0
        %505 = vmatmul.mubr.bf16.gmra.mrb[0].mxu0 %v253
        %v506 = vpop.f32.mrb[0].mxu0
        %v507 = vadd.f32 0.0, %v506
        %v508 = vpop.f32.mrb[0].mxu0
        %v509 = vpop.f32.mrb[0].mxu0
        %v510 = vadd.f32 0.0, %v509
        %v511 = vpop.f32.mrb[0].mxu0
        %512 = vdwg.mxu0
        %v513 = vld [vmem:[%s4] sm:$0x1]
        %v514 = vld [vmem:[%s4 + $0x1] sm:$0x1]
        %v515 = vld [vmem:[%s4 + $0x2] sm:$0x1]
        %v516 = vld [vmem:[%s4 + $0x3] sm:$0x1]
        %v517 = vld [vmem:[%s4 + $0x4] sm:$0x1]
        %v518 = vlaneseq
        %v519 = vshrl.u32 %v518, 7
        %v520 = vsub.s32 0, %v519
        %v521 = vrot.slane %v513, %v520
        %v522 = vadd.f32 %v353, %v521
        %v523 = vadd.f32 %v356, %v521
        %v524 = vadd.f32 %v361, %v521
        %v525 = vadd.f32 %v364, %v521
        %v526 = vadd.f32 %v369, %v521
        %v527 = vadd.f32 %v372, %v521
        %v528 = vadd.f32 %v377, %v521
        %v529 = vadd.f32 %v380, %v521
        %v530 = vmax.f32 %v522, 0.0
        %v531 = vmax.f32 %v523, 0.0
        %v532 = vmax.f32 %v524, 0.0
        %v533 = vmax.f32 %v525, 0.0
        %v534 = vmax.f32 %v526, 0.0
        %v535 = vmax.f32 %v527, 0.0
        %v536 = vmax.f32 %v528, 0.0
        %v537 = vmax.f32 %v529, 0.0
        %v538 = vld [vmem:[%s2] sm:$0xff]
        %v539 = vld [vmem:[%s2 + $0x8] sm:$0xff]
        %v540 = vld [vmem:[%s2 + $0x10] sm:$0xf]
        %vm541 = vcmask 162816
        %v543 = vsel %vm541, %v530, 0
        %v546 = vsel %vm541, %v531, 0
        %v549 = vsel %vm541, %v532, 0
        %v552 = vsel %vm541, %v533, 0
        %v555 = vsel %vm541, %v534, 0
        %v558 = vsel %vm541, %v535, 0
        %v561 = vsel %vm541, %v536, 0
        %v564 = vsel %vm541, %v537, 0
        %vm566 = vcmask 1043456
        %v568 = vsel %vm566, %v540, 0
        %570 = vmatprep.subr.mxu0 0.0
        %571 = vmatpush1.msra.mxu0 %v538
        %572 = vmatprep.subr.mxu0 0.0
        %573 = vmatpush1.msra.mxu0 %v539
        %574 = vmatprep.subr.mxu0 0.0
        %575 = vmatpush1.msra.mxu0 %v568
        %576 = vmatprep.subr.mxu0 0.0
        %577 = vmatpush1.msra.mxu0 0.0
        %578 = vmatprep.subr.mxu0 0.0
        %579 = vmatpush1.msra.mxu0 0.0
        %580 = vmatprep.subr.mxu0 0.0
        %581 = vmatpush1.msra.mxu0 0.0
        %582 = vmatprep.subr.mxu0 0.0
        %583 = vmatpush1.msra.mxu0 0.0
        %584 = vmatprep.subr.mxu0 0.0
        %585 = vmatpush1.msra.mxu0 0.0
        %586 = vmatprep.subr.mxu0 0.0
        %587 = vmatpush1.msra.mxu0 0.0
        %588 = vmatprep.subr.mxu0 0.0
        %589 = vmatpush1.msra.mxu0 0.0
        %590 = vmatprep.subr.mxu0 0.0
        %591 = vmatpush1.msra.mxu0 0.0
        %592 = vmatprep.subr.mxu0 0.0
        %593 = vmatpush1.msra.mxu0 0.0
        %594 = vmatprep.subr.mxu0 0.0
        %595 = vmatpush1.msra.mxu0 0.0
        %596 = vmatprep.subr.mxu0 0.0
        %597 = vmatpush1.msra.mxu0 0.0
        %598 = vmatprep.subr.mxu0 0.0
        %599 = vmatpush1.msra.mxu0 0.0
        %600 = vmatprep.subr.mxu0 0.0
        %601 = vmatpush1.msra.mxu0 0.0
        %602 = vmatprep.subr.mxu0 0.0
        %603 = vmatpush1.msra.mxu0 0.0
        %604 = vmatprep.subr.mxu0 0.0
        %605 = vmatpush1.msra.mxu0 0.0
        %606 = vmatprep.subr.mxu0 0.0
        %607 = vmatpush1.msra.mxu0 0.0
        %608 = vmatprep.subr.mxu0 0.0
        %609 = vmatpush1.msra.mxu0 0.0
        %610 = vmatprep.subr.mxu0 0.0
        %611 = vmatpush1.msra.mxu0 0.0
        %612 = vmatprep.subr.mxu0 0.0
        %613 = vmatpush1.msra.mxu0 0.0
        %614 = vmatprep.subr.mxu0 0.0
        %615 = vmatpush1.msra.mxu0 0.0
        %616 = vmatprep.subr.mxu0 0.0
        %617 = vmatpush1.msra.mxu0 0.0
        %618 = vmatprep.subr.mxu0 0.0
        %619 = vmatpush1.msra.mxu0 0.0
        %620 = vmatprep.subr.mxu0 0.0
        %621 = vmatpush1.msra.mxu0 0.0
        %622 = vmatprep.subr.mxu0 0.0
        %623 = vmatpush1.msra.mxu0 0.0
        %624 = vmatprep.subr.mxu0 0.0
        %625 = vmatpush1.msra.mxu0 0.0
        %626 = vmatprep.subr.mxu0 0.0
        %627 = vmatpush1.msra.mxu0 0.0
        %628 = vmatprep.subr.mxu0 0.0
        %629 = vmatpush1.msra.mxu0 0.0
        %630 = vmatprep.subr.mxu0 0.0
        %631 = vmatpush1.msra.mxu0 0.0
        %632 = vmatprep.subr.mxu0 0.0
        %633 = vmatpush1.msra.mxu0 0.0
        %634 = vmatprep.mubr.f32.mxu0 0.0
        %635 = vmatmul.mubr.f32.gmra.mrb[0].mxu0 %v543
        %v636 = vpop.f32.mrb[0].mxu0
        %v637 = vadd.f32 0.0, %v636
        %v638 = vpop.f32.mrb[0].mxu0
        %639 = vmatprep.mubr.f32.mxu0 0.0
        %640 = vmatmul.mubr.f32.gmra.mrb[0].mxu0 %v546
        %v641 = vpop.f32.mrb[0].mxu0
        %v642 = vadd.f32 0.0, %v641
        %v643 = vpop.f32.mrb[0].mxu0
        %644 = vmatprep.mubr.f32.mxu0 0.0
        %645 = vmatmul.mubr.f32.gmra.mrb[0].mxu0 %v549
        %v646 = vpop.f32.mrb[0].mxu0
        %v647 = vadd.f32 0.0, %v646
        %v648 = vpop.f32.mrb[0].mxu0
        %649 = vmatprep.mubr.f32.mxu0 0.0
        %650 = vmatmul.mubr.f32.gmra.mrb[0].mxu0 %v552
        %v651 = vpop.f32.mrb[0].mxu0
        %v652 = vadd.f32 0.0, %v651
        %v653 = vpop.f32.mrb[0].mxu0
        %654 = vmatprep.mubr.f32.mxu0 0.0
        %655 = vmatmul.mubr.f32.gmra.mrb[0].mxu0 %v555
        %v656 = vpop.f32.mrb[0].mxu0
        %v657 = vadd.f32 0.0, %v656
        %v658 = vpop.f32.mrb[0].mxu0
        %659 = vmatprep.mubr.f32.mxu0 0.0
        %660 = vmatmul.mubr.f32.gmra.mrb[0].mxu0 %v558
        %v661 = vpop.f32.mrb[0].mxu0
        %v662 = vadd.f32 0.0, %v661
        %v663 = vpop.f32.mrb[0].mxu0
        %664 = vmatprep.mubr.f32.mxu0 0.0
        %665 = vmatmul.mubr.f32.gmra.mrb[0].mxu0 %v561
        %v666 = vpop.f32.mrb[0].mxu0
        %v667 = vadd.f32 0.0, %v666
        %v668 = vpop.f32.mrb[0].mxu0
        %669 = vmatprep.mubr.f32.mxu0 0.0
        %670 = vmatmul.mubr.f32.gmra.mrb[0].mxu0 %v564
        %v671 = vpop.f32.mrb[0].mxu0
        %v672 = vadd.f32 0.0, %v671
        %v673 = vpop.f32.mrb[0].mxu0
        %674 = vdwg.mxu0
        %v675 = vadd.f32 %v483, %v637
        %v676 = vadd.f32 %v486, %v642
        %v677 = vadd.f32 %v491, %v647
        %v678 = vadd.f32 %v494, %v652
        %v679 = vadd.f32 %v499, %v657
        %v680 = vadd.f32 %v502, %v662
        %v681 = vadd.f32 %v507, %v667
        %v682 = vadd.f32 %v510, %v672
        %v683 = vlaneseq
        %v684 = vshrl.u32 %v683, 7
        %v685 = vsub.s32 0, %v684
        %v686 = vrot.slane %v514, %v685
        %v687 = vadd.f32 %v675, %v686
        %v688 = vadd.f32 %v676, %v686
        %v689 = vadd.f32 %v677, %v686
        %v690 = vadd.f32 %v678, %v686
        %v691 = vadd.f32 %v679, %v686
        %v692 = vadd.f32 %v680, %v686
        %v693 = vadd.f32 %v681, %v686
        %v694 = vadd.f32 %v682, %v686
        %v695 = vmax.f32 %v687, 0.0
        %v696 = vmax.f32 %v688, 0.0
        %v697 = vmax.f32 %v689, 0.0
        %v698 = vmax.f32 %v690, 0.0
        %v699 = vmax.f32 %v691, 0.0
        %v700 = vmax.f32 %v692, 0.0
        %v701 = vmax.f32 %v693, 0.0
        %v702 = vmax.f32 %v694, 0.0
        %s703 = scalar_lea.vmem %s2, 24
        %v704 = vld [vmem:[%s703] sm:$0xff]
        %v705 = vld [vmem:[%s703 + $0x8] sm:$0xff]
        %v706 = vld [vmem:[%s703 + $0x10] sm:$0xf]
        %v708 = vsel %vm541, %v695, 0
        %v711 = vsel %vm541, %v696, 0
        %v714 = vsel %vm541, %v697, 0
        %v717 = vsel %vm541, %v698, 0
        %v720 = vsel %vm541, %v699, 0
        %v723 = vsel %vm541, %v700, 0
        %v726 = vsel %vm541, %v701, 0
        %v729 = vsel %vm541, %v702, 0
        %v732 = vsel %vm566, %v706, 0
        %734 = vmatprep.subr.mxu0 0.0
        %735 = vmatpush1.msra.mxu0 %v704
        %736 = vmatprep.subr.mxu0 0.0
        %737 = vmatpush1.msra.mxu0 %v705
        %738 = vmatprep.subr.mxu0 0.0
        %739 = vmatpush1.msra.mxu0 %v732
        %740 = vmatprep.subr.mxu0 0.0
        %741 = vmatpush1.msra.mxu0 0.0
        %742 = vmatprep.subr.mxu0 0.0
        %743 = vmatpush1.msra.mxu0 0.0
        %744 = vmatprep.subr.mxu0 0.0
        %745 = vmatpush1.msra.mxu0 0.0
        %746 = vmatprep.subr.mxu0 0.0
        %747 = vmatpush1.msra.mxu0 0.0
        %748 = vmatprep.subr.mxu0 0.0
        %749 = vmatpush1.msra.mxu0 0.0
        %750 = vmatprep.subr.mxu0 0.0
        %751 = vmatpush1.msra.mxu0 0.0
        %752 = vmatprep.subr.mxu0 0.0
        %753 = vmatpush1.msra.mxu0 0.0
        %754 = vmatprep.subr.mxu0 0.0
        %755 = vmatpush1.msra.mxu0 0.0
        %756 = vmatprep.subr.mxu0 0.0
        %757 = vmatpush1.msra.mxu0 0.0
        %758 = vmatprep.subr.mxu0 0.0
        %759 = vmatpush1.msra.mxu0 0.0
        %760 = vmatprep.subr.mxu0 0.0
        %761 = vmatpush1.msra.mxu0 0.0
        %762 = vmatprep.subr.mxu0 0.0
        %763 = vmatpush1.msra.mxu0 0.0
        %764 = vmatprep.subr.mxu0 0.0
        %765 = vmatpush1.msra.mxu0 0.0
        %766 = vmatprep.subr.mxu0 0.0
        %767 = vmatpush1.msra.mxu0 0.0
        %768 = vmatprep.subr.mxu0 0.0
        %769 = vmatpush1.msra.mxu0 0.0
        %770 = vmatprep.subr.mxu0 0.0
        %771 = vmatpush1.msra.mxu0 0.0
        %772 = vmatprep.subr.mxu0 0.0
        %773 = vmatpush1.msra.mxu0 0.0
        %774 = vmatprep.subr.mxu0 0.0
        %775 = vmatpush1.msra.mxu0 0.0
        %776 = vmatprep.subr.mxu0 0.0
        %777 = vmatpush1.msra.mxu0 0.0
        %778 = vmatprep.subr.mxu0 0.0
        %779 = vmatpush1.msra.mxu0 0.0
        %780 = vmatprep.subr.mxu0 0.0
        %781 = vmatpush1.msra.mxu0 0.0
        %782 = vmatprep.subr.mxu0 0.0
        %783 = vmatpush1.msra.mxu0 0.0
        %784 = vmatprep.subr.mxu0 0.0
        %785 = vmatpush1.msra.mxu0 0.0
        %786 = vmatprep.subr.mxu0 0.0
        %787 = vmatpush1.msra.mxu0 0.0
        %788 = vmatprep.subr.mxu0 0.0
        %789 = vmatpush1.msra.mxu0 0.0
        %790 = vmatprep.subr.mxu0 0.0
        %791 = vmatpush1.msra.mxu0 0.0
        %792 = vmatprep.subr.mxu0 0.0
        %793 = vmatpush1.msra.mxu0 0.0
        %794 = vmatprep.subr.mxu0 0.0
        %795 = vmatpush1.msra.mxu0 0.0
        %796 = vmatprep.subr.mxu0 0.0
        %797 = vmatpush1.msra.mxu0 0.0
        %798 = vmatprep.mubr.f32.mxu0 0.0
        %799 = vmatmul.mubr.f32.gmra.mrb[0].mxu0 %v708
        %v800 = vpop.f32.mrb[0].mxu0
        %v801 = vadd.f32 0.0, %v800
        %v802 = vpop.f32.mrb[0].mxu0
        %803 = vmatprep.mubr.f32.mxu0 0.0
        %804 = vmatmul.mubr.f32.gmra.mrb[0].mxu0 %v711
        %v805 = vpop.f32.mrb[0].mxu0
        %v806 = vadd.f32 0.0, %v805
        %v807 = vpop.f32.mrb[0].mxu0
        %808 = vmatprep.mubr.f32.mxu0 0.0
        %809 = vmatmul.mubr.f32.gmra.mrb[0].mxu0 %v714
        %v810 = vpop.f32.mrb[0].mxu0
        %v811 = vadd.f32 0.0, %v810
        %v812 = vpop.f32.mrb[0].mxu0
        %813 = vmatprep.mubr.f32.mxu0 0.0
        %814 = vmatmul.mubr.f32.gmra.mrb[0].mxu0 %v717
        %v815 = vpop.f32.mrb[0].mxu0
        %v816 = vadd.f32 0.0, %v815
        %v817 = vpop.f32.mrb[0].mxu0
        %818 = vmatprep.mubr.f32.mxu0 0.0
        %819 = vmatmul.mubr.f32.gmra.mrb[0].mxu0 %v720
        %v820 = vpop.f32.mrb[0].mxu0
        %v821 = vadd.f32 0.0, %v820
        %v822 = vpop.f32.mrb[0].mxu0
        %823 = vmatprep.mubr.f32.mxu0 0.0
        %824 = vmatmul.mubr.f32.gmra.mrb[0].mxu0 %v723
        %v825 = vpop.f32.mrb[0].mxu0
        %v826 = vadd.f32 0.0, %v825
        %v827 = vpop.f32.mrb[0].mxu0
        %828 = vmatprep.mubr.f32.mxu0 0.0
        %829 = vmatmul.mubr.f32.gmra.mrb[0].mxu0 %v726
        %v830 = vpop.f32.mrb[0].mxu0
        %v831 = vadd.f32 0.0, %v830
        %v832 = vpop.f32.mrb[0].mxu0
        %833 = vmatprep.mubr.f32.mxu0 0.0
        %834 = vmatmul.mubr.f32.gmra.mrb[0].mxu0 %v729
        %v835 = vpop.f32.mrb[0].mxu0
        %v836 = vadd.f32 0.0, %v835
        %v837 = vpop.f32.mrb[0].mxu0
        %838 = vdwg.mxu0
        %847 = vrot.lane.b32.xlu0 %v801, 20
        %v848 = vpop.permute.xlu0 %847
        %849 = vrot.lane.b32.xlu0 %v806, 20
        %v850 = vpop.permute.xlu0 %849
        %851 = vrot.lane.b32.xlu0 %v811, 20
        %v852 = vpop.permute.xlu0 %851
        %853 = vrot.lane.b32.xlu0 %v816, 20
        %v854 = vpop.permute.xlu0 %853
        %855 = vrot.lane.b32.xlu0 %v821, 20
        %v856 = vpop.permute.xlu0 %855
        %857 = vrot.lane.b32.xlu0 %v826, 20
        %v858 = vpop.permute.xlu0 %857
        %859 = vrot.lane.b32.xlu0 %v831, 20
        %v860 = vpop.permute.xlu0 %859
        %861 = vrot.lane.b32.xlu0 %v836, 20
        %v862 = vpop.permute.xlu0 %861
        %v871 = vadd.f32 %v353, %v848
        %v872 = vadd.f32 %v356, %v850
        %v873 = vadd.f32 %v361, %v852
        %v874 = vadd.f32 %v364, %v854
        %v875 = vadd.f32 %v369, %v856
        %v876 = vadd.f32 %v372, %v858
        %v877 = vadd.f32 %v377, %v860
        %v878 = vadd.f32 %v380, %v862
        %v879 = vlaneseq
        %v880 = vshrl.u32 %v879, 7
        %v881 = vsub.s32 0, %v880
        %v882 = vrot.slane %v515, %v881
        %884 = vrot.lane.b32.xlu0 %v882, 20
        %v885 = vpop.permute.xlu0 %884
        %v887 = vadd.f32 %v871, %v885
        %v888 = vadd.f32 %v872, %v885
        %v889 = vadd.f32 %v873, %v885
        %v890 = vadd.f32 %v874, %v885
        %v891 = vadd.f32 %v875, %v885
        %v892 = vadd.f32 %v876, %v885
        %v893 = vadd.f32 %v877, %v885
        %v894 = vadd.f32 %v878, %v885
        %v895 = vmax.f32 %v887, 0.0
        %v896 = vmax.f32 %v888, 0.0
        %v897 = vmax.f32 %v889, 0.0
        %v898 = vmax.f32 %v890, 0.0
        %v899 = vmax.f32 %v891, 0.0
        %v900 = vmax.f32 %v892, 0.0
        %v901 = vmax.f32 %v893, 0.0
        %v902 = vmax.f32 %v894, 0.0
        %s903 = scalar_lea.vmem %s2, 48
        %v904 = vld [vmem:[%s903] sm:$0xff]
        %v905 = vld [vmem:[%s903 + $0x8] sm:$0xff]
        %v906 = vld [vmem:[%s903 + $0x10] sm:$0xf]
        %915 = vrot.lane.b32.xlu0 %v895, 108
        %v916 = vpop.permute.xlu0 %915
        %917 = vrot.lane.b32.xlu0 %v896, 108
        %v918 = vpop.permute.xlu0 %917
        %919 = vrot.lane.b32.xlu0 %v897, 108
        %v920 = vpop.permute.xlu0 %919
        %921 = vrot.lane.b32.xlu0 %v898, 108
        %v922 = vpop.permute.xlu0 %921
        %923 = vrot.lane.b32.xlu0 %v899, 108
        %v924 = vpop.permute.xlu0 %923
        %925 = vrot.lane.b32.xlu0 %v900, 108
        %v926 = vpop.permute.xlu0 %925
        %927 = vrot.lane.b32.xlu0 %v901, 108
        %v928 = vpop.permute.xlu0 %927
        %929 = vrot.lane.b32.xlu0 %v902, 108
        %v930 = vpop.permute.xlu0 %929
        %v931 = vsel %vm541, %v916, 0
        %v933 = vsel %vm541, %v918, 0
        %v935 = vsel %vm541, %v920, 0
        %v937 = vsel %vm541, %v922, 0
        %v939 = vsel %vm541, %v924, 0
        %v941 = vsel %vm541, %v926, 0
        %v943 = vsel %vm541, %v928, 0
        %v945 = vsel %vm541, %v930, 0
        %v948 = vsel %vm566, %v906, 0
        %950 = vmatprep.subr.mxu0 0.0
        %951 = vmatpush1.msra.mxu0 %v904
        %952 = vmatprep.subr.mxu0 0.0
        %953 = vmatpush1.msra.mxu0 %v905
        %954 = vmatprep.subr.mxu0 0.0
        %955 = vmatpush1.msra.mxu0 %v948
        %956 = vmatprep.subr.mxu0 0.0
        %957 = vmatpush1.msra.mxu0 0.0
        %958 = vmatprep.subr.mxu0 0.0
        %959 = vmatpush1.msra.mxu0 0.0
        %960 = vmatprep.subr.mxu0 0.0
        %961 = vmatpush1.msra.mxu0 0.0
        %962 = vmatprep.subr.mxu0 0.0
        %963 = vmatpush1.msra.mxu0 0.0
        %964 = vmatprep.subr.mxu0 0.0
        %965 = vmatpush1.msra.mxu0 0.0
        %966 = vmatprep.subr.mxu0 0.0
        %967 = vmatpush1.msra.mxu0 0.0
        %968 = vmatprep.subr.mxu0 0.0
        %969 = vmatpush1.msra.mxu0 0.0
        %970 = vmatprep.subr.mxu0 0.0
        %971 = vmatpush1.msra.mxu0 0.0
        %972 = vmatprep.subr.mxu0 0.0
        %973 = vmatpush1.msra.mxu0 0.0
        %974 = vmatprep.subr.mxu0 0.0
        %975 = vmatpush1.msra.mxu0 0.0
        %976 = vmatprep.subr.mxu0 0.0
        %977 = vmatpush1.msra.mxu0 0.0
        %978 = vmatprep.subr.mxu0 0.0
        %979 = vmatpush1.msra.mxu0 0.0
        %980 = vmatprep.subr.mxu0 0.0
        %981 = vmatpush1.msra.mxu0 0.0
        %982 = vmatprep.subr.mxu0 0.0
        %983 = vmatpush1.msra.mxu0 0.0
        %984 = vmatprep.subr.mxu0 0.0
        %985 = vmatpush1.msra.mxu0 0.0
        %986 = vmatprep.subr.mxu0 0.0
        %987 = vmatpush1.msra.mxu0 0.0
        %988 = vmatprep.subr.mxu0 0.0
        %989 = vmatpush1.msra.mxu0 0.0
        %990 = vmatprep.subr.mxu0 0.0
        %991 = vmatpush1.msra.mxu0 0.0
        %992 = vmatprep.subr.mxu0 0.0
        %993 = vmatpush1.msra.mxu0 0.0
        %994 = vmatprep.subr.mxu0 0.0
        %995 = vmatpush1.msra.mxu0 0.0
        %996 = vmatprep.subr.mxu0 0.0
        %997 = vmatpush1.msra.mxu0 0.0
        %998 = vmatprep.subr.mxu0 0.0
        %999 = vmatpush1.msra.mxu0 0.0
        %1000 = vmatprep.subr.mxu0 0.0
        %1001 = vmatpush1.msra.mxu0 0.0
        %1002 = vmatprep.subr.mxu0 0.0
        %1003 = vmatpush1.msra.mxu0 0.0
        %1004 = vmatprep.subr.mxu0 0.0
        %1005 = vmatpush1.msra.mxu0 0.0
        %1006 = vmatprep.subr.mxu0 0.0
        %1007 = vmatpush1.msra.mxu0 0.0
        %1008 = vmatprep.subr.mxu0 0.0
        %1009 = vmatpush1.msra.mxu0 0.0
        %1010 = vmatprep.subr.mxu0 0.0
        %1011 = vmatpush1.msra.mxu0 0.0
        %1012 = vmatprep.subr.mxu0 0.0
        %1013 = vmatpush1.msra.mxu0 0.0
        %1014 = vmatprep.mubr.f32.mxu0 0.0
        %1015 = vmatmul.mubr.f32.gmra.mrb[0].mxu0 %v931
        %v1016 = vpop.f32.mrb[0].mxu0
        %v1017 = vadd.f32 0.0, %v1016
        %v1018 = vpop.f32.mrb[0].mxu0
        %1019 = vmatprep.mubr.f32.mxu0 0.0
        %1020 = vmatmul.mubr.f32.gmra.mrb[0].mxu0 %v933
        %v1021 = vpop.f32.mrb[0].mxu0
        %v1022 = vadd.f32 0.0, %v1021
        %v1023 = vpop.f32.mrb[0].mxu0
        %1024 = vmatprep.mubr.f32.mxu0 0.0
        %1025 = vmatmul.mubr.f32.gmra.mrb[0].mxu0 %v935
        %v1026 = vpop.f32.mrb[0].mxu0
        %v1027 = vadd.f32 0.0, %v1026
        %v1028 = vpop.f32.mrb[0].mxu0
        %1029 = vmatprep.mubr.f32.mxu0 0.0
        %1030 = vmatmul.mubr.f32.gmra.mrb[0].mxu0 %v937
        %v1031 = vpop.f32.mrb[0].mxu0
        %v1032 = vadd.f32 0.0, %v1031
        %v1033 = vpop.f32.mrb[0].mxu0
        %1034 = vmatprep.mubr.f32.mxu0 0.0
        %1035 = vmatmul.mubr.f32.gmra.mrb[0].mxu0 %v939
        %v1036 = vpop.f32.mrb[0].mxu0
        %v1037 = vadd.f32 0.0, %v1036
        %v1038 = vpop.f32.mrb[0].mxu0
        %1039 = vmatprep.mubr.f32.mxu0 0.0
        %1040 = vmatmul.mubr.f32.gmra.mrb[0].mxu0 %v941
        %v1041 = vpop.f32.mrb[0].mxu0
        %v1042 = vadd.f32 0.0, %v1041
        %v1043 = vpop.f32.mrb[0].mxu0
        %1044 = vmatprep.mubr.f32.mxu0 0.0
        %1045 = vmatmul.mubr.f32.gmra.mrb[0].mxu0 %v943
        %v1046 = vpop.f32.mrb[0].mxu0
        %v1047 = vadd.f32 0.0, %v1046
        %v1048 = vpop.f32.mrb[0].mxu0
        %1049 = vmatprep.mubr.f32.mxu0 0.0
        %1050 = vmatmul.mubr.f32.gmra.mrb[0].mxu0 %v945
        %v1051 = vpop.f32.mrb[0].mxu0
        %v1052 = vadd.f32 0.0, %v1051
        %v1053 = vpop.f32.mrb[0].mxu0
        %1054 = vdwg.mxu0
        %1063 = vrot.lane.b32.xlu0 %v1017, 20
        %v1064 = vpop.permute.xlu0 %1063
        %1065 = vrot.lane.b32.xlu0 %v1022, 20
        %v1066 = vpop.permute.xlu0 %1065
        %1067 = vrot.lane.b32.xlu0 %v1027, 20
        %v1068 = vpop.permute.xlu0 %1067
        %1069 = vrot.lane.b32.xlu0 %v1032, 20
        %v1070 = vpop.permute.xlu0 %1069
        %1071 = vrot.lane.b32.xlu0 %v1037, 20
        %v1072 = vpop.permute.xlu0 %1071
        %1073 = vrot.lane.b32.xlu0 %v1042, 20
        %v1074 = vpop.permute.xlu0 %1073
        %1075 = vrot.lane.b32.xlu0 %v1047, 20
        %v1076 = vpop.permute.xlu0 %1075
        %1077 = vrot.lane.b32.xlu0 %v1052, 20
        %v1078 = vpop.permute.xlu0 %1077
        %v1087 = vadd.f32 %v483, %v1064
        %v1088 = vadd.f32 %v486, %v1066
        %v1089 = vadd.f32 %v491, %v1068
        %v1090 = vadd.f32 %v494, %v1070
        %v1091 = vadd.f32 %v499, %v1072
        %v1092 = vadd.f32 %v502, %v1074
        %v1093 = vadd.f32 %v507, %v1076
        %v1094 = vadd.f32 %v510, %v1078
        %v1095 = vlaneseq
        %v1096 = vshrl.u32 %v1095, 7
        %v1097 = vsub.s32 0, %v1096
        %v1098 = vrot.slane %v516, %v1097
        %1100 = vrot.lane.b32.xlu0 %v1098, 20
        %v1101 = vpop.permute.xlu0 %1100
        %v1103 = vadd.f32 %v1087, %v1101
        %v1104 = vadd.f32 %v1088, %v1101
        %v1105 = vadd.f32 %v1089, %v1101
        %v1106 = vadd.f32 %v1090, %v1101
        %v1107 = vadd.f32 %v1091, %v1101
        %v1108 = vadd.f32 %v1092, %v1101
        %v1109 = vadd.f32 %v1093, %v1101
        %v1110 = vadd.f32 %v1094, %v1101
        %v1111 = vmax.f32 %v1103, 0.0
        %v1112 = vmax.f32 %v1104, 0.0
        %v1113 = vmax.f32 %v1105, 0.0
        %v1114 = vmax.f32 %v1106, 0.0
        %v1115 = vmax.f32 %v1107, 0.0
        %v1116 = vmax.f32 %v1108, 0.0
        %v1117 = vmax.f32 %v1109, 0.0
        %v1118 = vmax.f32 %v1110, 0.0
        %v1119 = vld [vmem:[%s3] sm:$0xff]
        %v1120 = vld [vmem:[%s3 + $0x8] sm:$0xff]
        %v1121 = vld [vmem:[%s3 + $0x10] sm:$0xf]
        %s1122 = scalar_lea.vmem %s3, 24
        %v1123 = vld [vmem:[%s1122] sm:$0xff]
        %v1124 = vld [vmem:[%s1122 + $0x8] sm:$0xff]
        %v1125 = vld [vmem:[%s1122 + $0x10] sm:$0xf]
        %v1127 = vsel %vm566, %v1125, 0
        %1129 = vmatprep.subr.mxu0 0.0
        %1130 = vmatpush1.msra.mxu0 %v1123
        %1131 = vmatprep.subr.mxu0 0.0
        %1132 = vmatpush1.msra.mxu0 %v1124
        %1133 = vmatprep.subr.mxu0 0.0
        %1134 = vmatpush1.msra.mxu0 %v1127
        %1135 = vmatprep.subr.mxu0 0.0
        %1136 = vmatpush1.msra.mxu0 0.0
        %1137 = vmatprep.subr.mxu0 0.0
        %1138 = vmatpush1.msra.mxu0 0.0
        %1139 = vmatprep.subr.mxu0 0.0
        %1140 = vmatpush1.msra.mxu0 0.0
        %1141 = vmatprep.subr.mxu0 0.0
        %1142 = vmatpush1.msra.mxu0 0.0
        %1143 = vmatprep.subr.mxu0 0.0
        %1144 = vmatpush1.msra.mxu0 0.0
        %1145 = vmatprep.subr.mxu0 0.0
        %1146 = vmatpush1.msra.mxu0 0.0
        %1147 = vmatprep.subr.mxu0 0.0
        %1148 = vmatpush1.msra.mxu0 0.0
        %1149 = vmatprep.subr.mxu0 0.0
        %1150 = vmatpush1.msra.mxu0 0.0
        %1151 = vmatprep.subr.mxu0 0.0
        %1152 = vmatpush1.msra.mxu0 0.0
        %1153 = vmatprep.subr.mxu0 0.0
        %1154 = vmatpush1.msra.mxu0 0.0
        %1155 = vmatprep.subr.mxu0 0.0
        %1156 = vmatpush1.msra.mxu0 0.0
        %1157 = vmatprep.subr.mxu0 0.0
        %1158 = vmatpush1.msra.mxu0 0.0
        %1159 = vmatprep.subr.mxu0 0.0
        %1160 = vmatpush1.msra.mxu0 0.0
        %1161 = vmatprep.subr.mxu0 0.0
        %1162 = vmatpush1.msra.mxu0 0.0
        %1163 = vmatprep.subr.mxu0 0.0
        %1164 = vmatpush1.msra.mxu0 0.0
        %1165 = vmatprep.subr.mxu0 0.0
        %1166 = vmatpush1.msra.mxu0 0.0
        %1167 = vmatprep.subr.mxu0 0.0
        %1168 = vmatpush1.msra.mxu0 0.0
        %1169 = vmatprep.subr.mxu0 0.0
        %1170 = vmatpush1.msra.mxu0 0.0
        %1171 = vmatprep.subr.mxu0 0.0
        %1172 = vmatpush1.msra.mxu0 0.0
        %1173 = vmatprep.subr.mxu0 0.0
        %1174 = vmatpush1.msra.mxu0 0.0
        %1175 = vmatprep.subr.mxu0 0.0
        %1176 = vmatpush1.msra.mxu0 0.0
        %1177 = vmatprep.subr.mxu0 0.0
        %1178 = vmatpush1.msra.mxu0 0.0
        %1179 = vmatprep.subr.mxu0 0.0
        %1180 = vmatpush1.msra.mxu0 0.0
        %1181 = vmatprep.subr.mxu0 0.0
        %1182 = vmatpush1.msra.mxu0 0.0
        %1183 = vmatprep.subr.mxu0 0.0
        %1184 = vmatpush1.msra.mxu0 0.0
        %1185 = vmatprep.subr.mxu0 0.0
        %1186 = vmatpush1.msra.mxu0 0.0
        %1187 = vmatprep.subr.mxu0 0.0
        %1188 = vmatpush1.msra.mxu0 0.0
        %1189 = vmatprep.subr.mxu0 0.0
        %1190 = vmatpush1.msra.mxu0 0.0
        %1191 = vmatprep.subr.mxu0 0.0
        %1192 = vmatpush1.msra.mxu0 0.0
        %1193 = vmatprep.mubr.f32.mxu0 0.0
        %1194 = vmatmul.mubr.f32.gmra.mrb[0].mxu0 %v708
        %v1195 = vpop.f32.mrb[0].mxu0
        %v1196 = vadd.f32 0.0, %v1195
        %v1197 = vpop.f32.mrb[0].mxu0
        %1198 = vmatprep.mubr.f32.mxu0 0.0
        %1199 = vmatmul.mubr.f32.gmra.mrb[0].mxu0 %v711
        %v1200 = vpop.f32.mrb[0].mxu0
        %v1201 = vadd.f32 0.0, %v1200
        %v1202 = vpop.f32.mrb[0].mxu0
        %1203 = vmatprep.mubr.f32.mxu0 0.0
        %1204 = vmatmul.mubr.f32.gmra.mrb[0].mxu0 %v714
        %v1205 = vpop.f32.mrb[0].mxu0
        %v1206 = vadd.f32 0.0, %v1205
        %v1207 = vpop.f32.mrb[0].mxu0
        %1208 = vmatprep.mubr.f32.mxu0 0.0
        %1209 = vmatmul.mubr.f32.gmra.mrb[0].mxu0 %v717
        %v1210 = vpop.f32.mrb[0].mxu0
        %v1211 = vadd.f32 0.0, %v1210
        %v1212 = vpop.f32.mrb[0].mxu0
        %1213 = vmatprep.mubr.f32.mxu0 0.0
        %1214 = vmatmul.mubr.f32.gmra.mrb[0].mxu0 %v720
        %v1215 = vpop.f32.mrb[0].mxu0
        %v1216 = vadd.f32 0.0, %v1215
        %v1217 = vpop.f32.mrb[0].mxu0
        %1218 = vmatprep.mubr.f32.mxu0 0.0
        %1219 = vmatmul.mubr.f32.gmra.mrb[0].mxu0 %v723
        %v1220 = vpop.f32.mrb[0].mxu0
        %v1221 = vadd.f32 0.0, %v1220
        %v1222 = vpop.f32.mrb[0].mxu0
        %1223 = vmatprep.mubr.f32.mxu0 0.0
        %1224 = vmatmul.mubr.f32.gmra.mrb[0].mxu0 %v726
        %v1225 = vpop.f32.mrb[0].mxu0
        %v1226 = vadd.f32 0.0, %v1225
        %v1227 = vpop.f32.mrb[0].mxu0
        %1228 = vmatprep.mubr.f32.mxu0 0.0
        %1229 = vmatmul.mubr.f32.gmra.mrb[0].mxu0 %v729
        %v1230 = vpop.f32.mrb[0].mxu0
        %v1231 = vadd.f32 0.0, %v1230
        %v1232 = vpop.f32.mrb[0].mxu0
        %1233 = vdwg.mxu0
        %v1235 = vsel %vm566, %v1121, 0
        %1237 = vmatprep.subr.mxu0 0.0
        %1238 = vmatpush1.msra.mxu0 %v1119
        %1239 = vmatprep.subr.mxu0 0.0
        %1240 = vmatpush1.msra.mxu0 %v1120
        %1241 = vmatprep.subr.mxu0 0.0
        %1242 = vmatpush1.msra.mxu0 %v1235
        %1243 = vmatprep.subr.mxu0 0.0
        %1244 = vmatpush1.msra.mxu0 0.0
        %1245 = vmatprep.subr.mxu0 0.0
        %1246 = vmatpush1.msra.mxu0 0.0
        %1247 = vmatprep.subr.mxu0 0.0
        %1248 = vmatpush1.msra.mxu0 0.0
        %1249 = vmatprep.subr.mxu0 0.0
        %1250 = vmatpush1.msra.mxu0 0.0
        %1251 = vmatprep.subr.mxu0 0.0
        %1252 = vmatpush1.msra.mxu0 0.0
        %1253 = vmatprep.subr.mxu0 0.0
        %1254 = vmatpush1.msra.mxu0 0.0
        %1255 = vmatprep.subr.mxu0 0.0
        %1256 = vmatpush1.msra.mxu0 0.0
        %1257 = vmatprep.subr.mxu0 0.0
        %1258 = vmatpush1.msra.mxu0 0.0
        %1259 = vmatprep.subr.mxu0 0.0
        %1260 = vmatpush1.msra.mxu0 0.0
        %1261 = vmatprep.subr.mxu0 0.0
        %1262 = vmatpush1.msra.mxu0 0.0
        %1263 = vmatprep.subr.mxu0 0.0
        %1264 = vmatpush1.msra.mxu0 0.0
        %1265 = vmatprep.subr.mxu0 0.0
        %1266 = vmatpush1.msra.mxu0 0.0
        %1267 = vmatprep.subr.mxu0 0.0
        %1268 = vmatpush1.msra.mxu0 0.0
        %1269 = vmatprep.subr.mxu0 0.0
        %1270 = vmatpush1.msra.mxu0 0.0
        %1271 = vmatprep.subr.mxu0 0.0
        %1272 = vmatpush1.msra.mxu0 0.0
        %1273 = vmatprep.subr.mxu0 0.0
        %1274 = vmatpush1.msra.mxu0 0.0
        %1275 = vmatprep.subr.mxu0 0.0
        %1276 = vmatpush1.msra.mxu0 0.0
        %1277 = vmatprep.subr.mxu0 0.0
        %1278 = vmatpush1.msra.mxu0 0.0
        %1279 = vmatprep.subr.mxu0 0.0
        %1280 = vmatpush1.msra.mxu0 0.0
        %1281 = vmatprep.subr.mxu0 0.0
        %1282 = vmatpush1.msra.mxu0 0.0
        %1283 = vmatprep.subr.mxu0 0.0
        %1284 = vmatpush1.msra.mxu0 0.0
        %1285 = vmatprep.subr.mxu0 0.0
        %1286 = vmatpush1.msra.mxu0 0.0
        %1287 = vmatprep.subr.mxu0 0.0
        %1288 = vmatpush1.msra.mxu0 0.0
        %1289 = vmatprep.subr.mxu0 0.0
        %1290 = vmatpush1.msra.mxu0 0.0
        %1291 = vmatprep.subr.mxu0 0.0
        %1292 = vmatpush1.msra.mxu0 0.0
        %1293 = vmatprep.subr.mxu0 0.0
        %1294 = vmatpush1.msra.mxu0 0.0
        %1295 = vmatprep.subr.mxu0 0.0
        %1296 = vmatpush1.msra.mxu0 0.0
        %1297 = vmatprep.subr.mxu0 0.0
        %1298 = vmatpush1.msra.mxu0 0.0
        %1299 = vmatprep.subr.mxu0 0.0
        %1300 = vmatpush1.msra.mxu0 0.0
        %1301 = vmatprep.mubr.f32.mxu0 0.0
        %1302 = vmatmul.mubr.f32.gmra.mrb[0].mxu0 %v543
        %v1303 = vpop.f32.mrb[0].mxu0
        %v1304 = vadd.f32 %v1196, %v1303
        %v1305 = vpop.f32.mrb[0].mxu0
        %1306 = vmatprep.mubr.f32.mxu0 0.0
        %1307 = vmatmul.mubr.f32.gmra.mrb[0].mxu0 %v546
        %v1308 = vpop.f32.mrb[0].mxu0
        %v1309 = vadd.f32 %v1201, %v1308
        %v1310 = vpop.f32.mrb[0].mxu0
        %1311 = vmatprep.mubr.f32.mxu0 0.0
        %1312 = vmatmul.mubr.f32.gmra.mrb[0].mxu0 %v549
        %v1313 = vpop.f32.mrb[0].mxu0
        %v1314 = vadd.f32 %v1206, %v1313
        %v1315 = vpop.f32.mrb[0].mxu0
        %1316 = vmatprep.mubr.f32.mxu0 0.0
        %1317 = vmatmul.mubr.f32.gmra.mrb[0].mxu0 %v552
        %v1318 = vpop.f32.mrb[0].mxu0
        %v1319 = vadd.f32 %v1211, %v1318
        %v1320 = vpop.f32.mrb[0].mxu0
        %1321 = vmatprep.mubr.f32.mxu0 0.0
        %1322 = vmatmul.mubr.f32.gmra.mrb[0].mxu0 %v555
        %v1323 = vpop.f32.mrb[0].mxu0
        %v1324 = vadd.f32 %v1216, %v1323
        %v1325 = vpop.f32.mrb[0].mxu0
        %1326 = vmatprep.mubr.f32.mxu0 0.0
        %1327 = vmatmul.mubr.f32.gmra.mrb[0].mxu0 %v558
        %v1328 = vpop.f32.mrb[0].mxu0
        %v1329 = vadd.f32 %v1221, %v1328
        %v1330 = vpop.f32.mrb[0].mxu0
        %1331 = vmatprep.mubr.f32.mxu0 0.0
        %1332 = vmatmul.mubr.f32.gmra.mrb[0].mxu0 %v561
        %v1333 = vpop.f32.mrb[0].mxu0
        %v1334 = vadd.f32 %v1226, %v1333
        %v1335 = vpop.f32.mrb[0].mxu0
        %1336 = vmatprep.mubr.f32.mxu0 0.0
        %1337 = vmatmul.mubr.f32.gmra.mrb[0].mxu0 %v564
        %v1338 = vpop.f32.mrb[0].mxu0
        %v1339 = vadd.f32 %v1231, %v1338
        %v1340 = vpop.f32.mrb[0].mxu0
        %1341 = vdwg.mxu0
        %s1342 = scalar_lea.vmem %s3, 48
        %v1343 = vld [vmem:[%s1342] sm:$0xff]
        %v1344 = vld [vmem:[%s1342 + $0x8] sm:$0xff]
        %v1345 = vld [vmem:[%s1342 + $0x10] sm:$0xf]
        %v1347 = vsel %vm566, %v1345, 0
        %1349 = vmatprep.subr.mxu0 0.0
        %1350 = vmatpush1.msra.mxu0 %v1343
        %1351 = vmatprep.subr.mxu0 0.0
        %1352 = vmatpush1.msra.mxu0 %v1344
        %1353 = vmatprep.subr.mxu0 0.0
        %1354 = vmatpush1.msra.mxu0 %v1347
        %1355 = vmatprep.subr.mxu0 0.0
        %1356 = vmatpush1.msra.mxu0 0.0
        %1357 = vmatprep.subr.mxu0 0.0
        %1358 = vmatpush1.msra.mxu0 0.0
        %1359 = vmatprep.subr.mxu0 0.0
        %1360 = vmatpush1.msra.mxu0 0.0
        %1361 = vmatprep.subr.mxu0 0.0
        %1362 = vmatpush1.msra.mxu0 0.0
        %1363 = vmatprep.subr.mxu0 0.0
        %1364 = vmatpush1.msra.mxu0 0.0
        %1365 = vmatprep.subr.mxu0 0.0
        %1366 = vmatpush1.msra.mxu0 0.0
        %1367 = vmatprep.subr.mxu0 0.0
        %1368 = vmatpush1.msra.mxu0 0.0
        %1369 = vmatprep.subr.mxu0 0.0
        %1370 = vmatpush1.msra.mxu0 0.0
        %1371 = vmatprep.subr.mxu0 0.0
        %1372 = vmatpush1.msra.mxu0 0.0
        %1373 = vmatprep.subr.mxu0 0.0
        %1374 = vmatpush1.msra.mxu0 0.0
        %1375 = vmatprep.subr.mxu0 0.0
        %1376 = vmatpush1.msra.mxu0 0.0
        %1377 = vmatprep.subr.mxu0 0.0
        %1378 = vmatpush1.msra.mxu0 0.0
        %1379 = vmatprep.subr.mxu0 0.0
        %1380 = vmatpush1.msra.mxu0 0.0
        %1381 = vmatprep.subr.mxu0 0.0
        %1382 = vmatpush1.msra.mxu0 0.0
        %1383 = vmatprep.subr.mxu0 0.0
        %1384 = vmatpush1.msra.mxu0 0.0
        %1385 = vmatprep.subr.mxu0 0.0
        %1386 = vmatpush1.msra.mxu0 0.0
        %1387 = vmatprep.subr.mxu0 0.0
        %1388 = vmatpush1.msra.mxu0 0.0
        %1389 = vmatprep.subr.mxu0 0.0
        %1390 = vmatpush1.msra.mxu0 0.0
        %1391 = vmatprep.subr.mxu0 0.0
        %1392 = vmatpush1.msra.mxu0 0.0
        %1393 = vmatprep.subr.mxu0 0.0
        %1394 = vmatpush1.msra.mxu0 0.0
        %1395 = vmatprep.subr.mxu0 0.0
        %1396 = vmatpush1.msra.mxu0 0.0
        %1397 = vmatprep.subr.mxu0 0.0
        %1398 = vmatpush1.msra.mxu0 0.0
        %1399 = vmatprep.subr.mxu0 0.0
        %1400 = vmatpush1.msra.mxu0 0.0
        %1401 = vmatprep.subr.mxu0 0.0
        %1402 = vmatpush1.msra.mxu0 0.0
        %1403 = vmatprep.subr.mxu0 0.0
        %1404 = vmatpush1.msra.mxu0 0.0
        %1405 = vmatprep.subr.mxu0 0.0
        %1406 = vmatpush1.msra.mxu0 0.0
        %1407 = vmatprep.subr.mxu0 0.0
        %1408 = vmatpush1.msra.mxu0 0.0
        %1409 = vmatprep.subr.mxu0 0.0
        %1410 = vmatpush1.msra.mxu0 0.0
        %1411 = vmatprep.subr.mxu0 0.0
        %1412 = vmatpush1.msra.mxu0 0.0
        %1413 = vmatprep.mubr.f32.mxu0 0.0
        %1414 = vmatmul.mubr.f32.gmra.mrb[0].mxu0 %v931
        %v1415 = vpop.f32.mrb[0].mxu0
        %v1416 = vadd.f32 0.0, %v1415
        %v1417 = vpop.f32.mrb[0].mxu0
        %1418 = vmatprep.mubr.f32.mxu0 0.0
        %1419 = vmatmul.mubr.f32.gmra.mrb[0].mxu0 %v933
        %v1420 = vpop.f32.mrb[0].mxu0
        %v1421 = vadd.f32 0.0, %v1420
        %v1422 = vpop.f32.mrb[0].mxu0
        %1423 = vmatprep.mubr.f32.mxu0 0.0
        %1424 = vmatmul.mubr.f32.gmra.mrb[0].mxu0 %v935
        %v1425 = vpop.f32.mrb[0].mxu0
        %v1426 = vadd.f32 0.0, %v1425
        %v1427 = vpop.f32.mrb[0].mxu0
        %1428 = vmatprep.mubr.f32.mxu0 0.0
        %1429 = vmatmul.mubr.f32.gmra.mrb[0].mxu0 %v937
        %v1430 = vpop.f32.mrb[0].mxu0
        %v1431 = vadd.f32 0.0, %v1430
        %v1432 = vpop.f32.mrb[0].mxu0
        %1433 = vmatprep.mubr.f32.mxu0 0.0
        %1434 = vmatmul.mubr.f32.gmra.mrb[0].mxu0 %v939
        %v1435 = vpop.f32.mrb[0].mxu0
        %v1436 = vadd.f32 0.0, %v1435
        %v1437 = vpop.f32.mrb[0].mxu0
        %1438 = vmatprep.mubr.f32.mxu0 0.0
        %1439 = vmatmul.mubr.f32.gmra.mrb[0].mxu0 %v941
        %v1440 = vpop.f32.mrb[0].mxu0
        %v1441 = vadd.f32 0.0, %v1440
        %v1442 = vpop.f32.mrb[0].mxu0
        %1443 = vmatprep.mubr.f32.mxu0 0.0
        %1444 = vmatmul.mubr.f32.gmra.mrb[0].mxu0 %v943
        %v1445 = vpop.f32.mrb[0].mxu0
        %v1446 = vadd.f32 0.0, %v1445
        %v1447 = vpop.f32.mrb[0].mxu0
        %1448 = vmatprep.mubr.f32.mxu0 0.0
        %1449 = vmatmul.mubr.f32.gmra.mrb[0].mxu0 %v945
        %v1450 = vpop.f32.mrb[0].mxu0
        %v1451 = vadd.f32 0.0, %v1450
        %v1452 = vpop.f32.mrb[0].mxu0
        %1453 = vdwg.mxu0
        %v1454 = vadd.f32 %v1304, %v1416
        %v1455 = vadd.f32 %v1309, %v1421
        %v1456 = vadd.f32 %v1314, %v1426
        %v1457 = vadd.f32 %v1319, %v1431
        %v1458 = vadd.f32 %v1324, %v1436
        %v1459 = vadd.f32 %v1329, %v1441
        %v1460 = vadd.f32 %v1334, %v1446
        %v1461 = vadd.f32 %v1339, %v1451
        %s1462 = scalar_lea.vmem %s3, 72
        %v1463 = vld [vmem:[%s1462] sm:$0xff]
        %v1464 = vld [vmem:[%s1462 + $0x8] sm:$0xff]
        %v1465 = vld [vmem:[%s1462 + $0x10] sm:$0xf]
        %1474 = vrot.lane.b32.xlu0 %v1111, 108
        %v1475 = vpop.permute.xlu0 %1474
        %1476 = vrot.lane.b32.xlu0 %v1112, 108
        %v1477 = vpop.permute.xlu0 %1476
        %1478 = vrot.lane.b32.xlu0 %v1113, 108
        %v1479 = vpop.permute.xlu0 %1478
        %1480 = vrot.lane.b32.xlu0 %v1114, 108
        %v1481 = vpop.permute.xlu0 %1480
        %1482 = vrot.lane.b32.xlu0 %v1115, 108
        %v1483 = vpop.permute.xlu0 %1482
        %1484 = vrot.lane.b32.xlu0 %v1116, 108
        %v1485 = vpop.permute.xlu0 %1484
        %1486 = vrot.lane.b32.xlu0 %v1117, 108
        %v1487 = vpop.permute.xlu0 %1486
        %1488 = vrot.lane.b32.xlu0 %v1118, 108
        %v1489 = vpop.permute.xlu0 %1488
        %v1490 = vsel %vm541, %v1475, 0
        %v1492 = vsel %vm541, %v1477, 0
        %v1494 = vsel %vm541, %v1479, 0
        %v1496 = vsel %vm541, %v1481, 0
        %v1498 = vsel %vm541, %v1483, 0
        %v1500 = vsel %vm541, %v1485, 0
        %v1502 = vsel %vm541, %v1487, 0
        %v1504 = vsel %vm541, %v1489, 0
        %v1507 = vsel %vm566, %v1465, 0
        %1509 = vmatprep.subr.mxu0 0.0
        %1510 = vmatpush1.msra.mxu0 %v1463
        %1511 = vmatprep.subr.mxu0 0.0
        %1512 = vmatpush1.msra.mxu0 %v1464
        %1513 = vmatprep.subr.mxu0 0.0
        %1514 = vmatpush1.msra.mxu0 %v1507
        %1515 = vmatprep.subr.mxu0 0.0
        %1516 = vmatpush1.msra.mxu0 0.0
        %1517 = vmatprep.subr.mxu0 0.0
        %1518 = vmatpush1.msra.mxu0 0.0
        %1519 = vmatprep.subr.mxu0 0.0
        %1520 = vmatpush1.msra.mxu0 0.0
        %1521 = vmatprep.subr.mxu0 0.0
        %1522 = vmatpush1.msra.mxu0 0.0
        %1523 = vmatprep.subr.mxu0 0.0
        %1524 = vmatpush1.msra.mxu0 0.0
        %1525 = vmatprep.subr.mxu0 0.0
        %1526 = vmatpush1.msra.mxu0 0.0
        %1527 = vmatprep.subr.mxu0 0.0
        %1528 = vmatpush1.msra.mxu0 0.0
        %1529 = vmatprep.subr.mxu0 0.0
        %1530 = vmatpush1.msra.mxu0 0.0
        %1531 = vmatprep.subr.mxu0 0.0
        %1532 = vmatpush1.msra.mxu0 0.0
        %1533 = vmatprep.subr.mxu0 0.0
        %1534 = vmatpush1.msra.mxu0 0.0
        %1535 = vmatprep.subr.mxu0 0.0
        %1536 = vmatpush1.msra.mxu0 0.0
        %1537 = vmatprep.subr.mxu0 0.0
        %1538 = vmatpush1.msra.mxu0 0.0
        %1539 = vmatprep.subr.mxu0 0.0
        %1540 = vmatpush1.msra.mxu0 0.0
        %1541 = vmatprep.subr.mxu0 0.0
        %1542 = vmatpush1.msra.mxu0 0.0
        %1543 = vmatprep.subr.mxu0 0.0
        %1544 = vmatpush1.msra.mxu0 0.0
        %1545 = vmatprep.subr.mxu0 0.0
        %1546 = vmatpush1.msra.mxu0 0.0
        %1547 = vmatprep.subr.mxu0 0.0
        %1548 = vmatpush1.msra.mxu0 0.0
        %1549 = vmatprep.subr.mxu0 0.0
        %1550 = vmatpush1.msra.mxu0 0.0
        %1551 = vmatprep.subr.mxu0 0.0
        %1552 = vmatpush1.msra.mxu0 0.0
        %1553 = vmatprep.subr.mxu0 0.0
        %1554 = vmatpush1.msra.mxu0 0.0
        %1555 = vmatprep.subr.mxu0 0.0
        %1556 = vmatpush1.msra.mxu0 0.0
        %1557 = vmatprep.subr.mxu0 0.0
        %1558 = vmatpush1.msra.mxu0 0.0
        %1559 = vmatprep.subr.mxu0 0.0
        %1560 = vmatpush1.msra.mxu0 0.0
        %1561 = vmatprep.subr.mxu0 0.0
        %1562 = vmatpush1.msra.mxu0 0.0
        %1563 = vmatprep.subr.mxu0 0.0
        %1564 = vmatpush1.msra.mxu0 0.0
        %1565 = vmatprep.subr.mxu0 0.0
        %1566 = vmatpush1.msra.mxu0 0.0
        %1567 = vmatprep.subr.mxu0 0.0
        %1568 = vmatpush1.msra.mxu0 0.0
        %1569 = vmatprep.subr.mxu0 0.0
        %1570 = vmatpush1.msra.mxu0 0.0
        %1571 = vmatprep.subr.mxu0 0.0
        %1572 = vmatpush1.msra.mxu0 0.0
        %1573 = vmatprep.mubr.f32.mxu0 0.0
        %1574 = vmatmul.mubr.f32.gmra.mrb[0].mxu0 %v1490
        %v1575 = vpop.f32.mrb[0].mxu0
        %v1576 = vadd.f32 0.0, %v1575
        %v1577 = vpop.f32.mrb[0].mxu0
        %1578 = vmatprep.mubr.f32.mxu0 0.0
        %1579 = vmatmul.mubr.f32.gmra.mrb[0].mxu0 %v1492
        %v1580 = vpop.f32.mrb[0].mxu0
        %v1581 = vadd.f32 0.0, %v1580
        %v1582 = vpop.f32.mrb[0].mxu0
        %1583 = vmatprep.mubr.f32.mxu0 0.0
        %1584 = vmatmul.mubr.f32.gmra.mrb[0].mxu0 %v1494
        %v1585 = vpop.f32.mrb[0].mxu0
        %v1586 = vadd.f32 0.0, %v1585
        %v1587 = vpop.f32.mrb[0].mxu0
        %1588 = vmatprep.mubr.f32.mxu0 0.0
        %1589 = vmatmul.mubr.f32.gmra.mrb[0].mxu0 %v1496
        %v1590 = vpop.f32.mrb[0].mxu0
        %v1591 = vadd.f32 0.0, %v1590
        %v1592 = vpop.f32.mrb[0].mxu0
        %1593 = vmatprep.mubr.f32.mxu0 0.0
        %1594 = vmatmul.mubr.f32.gmra.mrb[0].mxu0 %v1498
        %v1595 = vpop.f32.mrb[0].mxu0
        %v1596 = vadd.f32 0.0, %v1595
        %v1597 = vpop.f32.mrb[0].mxu0
        %1598 = vmatprep.mubr.f32.mxu0 0.0
        %1599 = vmatmul.mubr.f32.gmra.mrb[0].mxu0 %v1500
        %v1600 = vpop.f32.mrb[0].mxu0
        %v1601 = vadd.f32 0.0, %v1600
        %v1602 = vpop.f32.mrb[0].mxu0
        %1603 = vmatprep.mubr.f32.mxu0 0.0
        %1604 = vmatmul.mubr.f32.gmra.mrb[0].mxu0 %v1502
        %v1605 = vpop.f32.mrb[0].mxu0
        %v1606 = vadd.f32 0.0, %v1605
        %v1607 = vpop.f32.mrb[0].mxu0
        %1608 = vmatprep.mubr.f32.mxu0 0.0
        %1609 = vmatmul.mubr.f32.gmra.mrb[0].mxu0 %v1504
        %v1610 = vpop.f32.mrb[0].mxu0
        %v1611 = vadd.f32 0.0, %v1610
        %v1612 = vpop.f32.mrb[0].mxu0
        %1613 = vdwg.mxu0
        %v1614 = vadd.f32 %v1454, %v1576
        %v1615 = vadd.f32 %v1455, %v1581
        %v1616 = vadd.f32 %v1456, %v1586
        %v1617 = vadd.f32 %v1457, %v1591
        %v1618 = vadd.f32 %v1458, %v1596
        %v1619 = vadd.f32 %v1459, %v1601
        %v1620 = vadd.f32 %v1460, %v1606
        %v1621 = vadd.f32 %v1461, %v1611
        %v1622 = vlaneseq
        %v1623 = vshrl.u32 %v1622, 7
        %v1624 = vsub.s32 0, %v1623
        %v1625 = vrot.slane %v517, %v1624
        %v1626 = vadd.f32 %v1614, %v1625
        %v1627 = vadd.f32 %v1615, %v1625
        %v1628 = vadd.f32 %v1616, %v1625
        %v1629 = vadd.f32 %v1617, %v1625
        %v1630 = vadd.f32 %v1618, %v1625
        %v1631 = vadd.f32 %v1619, %v1625
        %v1632 = vadd.f32 %v1620, %v1625
        %v1633 = vadd.f32 %v1621, %v1625
        %v1634 = vpack.c.bf16 %v1627, %v1626
        %v1635 = vpack.c.bf16 %v1629, %v1628
        %v1636 = vpack.c.bf16 %v1631, %v1630
        %v1637 = vpack.c.bf16 %v1633, %v1632
        %v1642 = vunpack.c.l.b16 %v1634
        %v1643 = vunpack.c.h.b16 %v1634
        %v1644 = vunpack.c.l.b16 %v1635
        %v1645 = vunpack.c.h.b16 %v1635
        %v1646 = vunpack.c.l.b16 %v1636
        %v1647 = vunpack.c.h.b16 %v1636
        %v1648 = vunpack.c.l.b16 %v1637
        %v1649 = vunpack.c.h.b16 %v1637
        %v1650 = vpack.c.b16 %v1642, %v1642
        %v1651 = vpack.c.b16 %v1643, %v1643
        %v1652 = vpack.c.b16 %v1644, %v1644
        %v1653 = vpack.c.b16 %v1645, %v1645
        %v1654 = vpack.c.b16 %v1646, %v1646
        %v1655 = vpack.c.b16 %v1647, %v1647
        %v1656 = vpack.c.b16 %v1648, %v1648
        %v1657 = vpack.c.b16 %v1649, %v1649
        %1666 = vst [vmem:[%s220] sm:$0xf] %v1650
        %1667 = vst [vmem:[%s220 + $0x4] sm:$0xf] %v1651
        %1668 = vst [vmem:[%s220 + $0x8] sm:$0xf] %v1652
        %1669 = vst [vmem:[%s220 + $0xc] sm:$0xf] %v1653
        %1670 = vst [vmem:[%s220 + $0x10] sm:$0xf] %v1654
        %1671 = vst [vmem:[%s220 + $0x14] sm:$0xf] %v1655
        %1672 = vst [vmem:[%s220 + $0x18] sm:$0xf] %v1656
        %1673 = vst [vmem:[%s220 + $0x1c] sm:$0xf] %v1657
        %s1674 = sand.u32 %s137, 1
        %s1675 = scalar_lea.sflag [#allocation3], %s1674
        %s1676 = sand.u32 %s137, 1
        %s1677 = smul.addr %s1676, 32
        %s1678 = scalar_lea.vmem [#allocation2], %s1677
        // Predicated region
        $region41: #{tpu_custom_call.1} parent=39 // pred_check
          %p1679 = pneg %p147
        $region42: #{tpu_custom_call.1} parent=39 // pred_check_branch
          %1681 = sbr.rel (%p1679) target = $region44
        $region43: #{tpu_custom_call.1} parent=39 // pred_region
          %s1682 = smul.u32 8, %s19
          %s1684 = ssub.s32 512, 512
          %1685 = vsyncadd %s1675, %s1684
          %s1686 = smul.addr %s1682, 64
          %s1687 = scalar_lea.hbm %s5, %s1686
          %s1688 = sshll.u32 %s1678, 4
          %s1689 = int_to_ptr.vmem [resolvable:$true] %s1688
          %1694 = dma.vmem_to_hbm [thread:$0]  %s1689, 512, %s1687, %s1675, 64, 64, 4
        $region44: #{tpu_custom_call.1} parent=39 // pred_fallthru
          _
      $region40: #{tpu_custom_call.1} parent=5 // pred_fallthru
        _
      %p1695 = scmp.le.s32.totalorder 2, %s14
      // Predicated region
      $region45: #{tpu_custom_call.1} parent=5 // pred_check
        %p1696 = pneg %p1695
      $region46: #{tpu_custom_call.1} parent=5 // pred_check_branch
        %1698 = sbr.rel (%p1696) target = $region48
      $region47: #{tpu_custom_call.1} parent=5 // pred_region
        %s1699 = ssub.s32 %s14, 2
        // Predicated region
        $region49: #{tpu_custom_call.1} parent=47 // pred_check
          %p1700 = pneg %p153
        $region50: #{tpu_custom_call.1} parent=47 // pred_check_branch
          %1702 = sbr.rel (%p1700) target = $region52
        $region51: #{tpu_custom_call.1} parent=47 // pred_region
          %s1703 = sand.u32 %s138, 1
          %s1704 = scalar_lea.sflag [#allocation3], %s1703
          %s1705 = sand.u32 %s138, 1
          %s1706 = smul.addr %s1705, 32
          %s1707 = scalar_lea.vmem [#allocation2], %s1706
          %1708 = dma.done %s1704, 512
        $region52: #{tpu_custom_call.1} parent=47 // pred_fallthru
          _
      $region48: #{tpu_custom_call.1} parent=5 // pred_fallthru
        _
    $region6: #{tpu_custom_call.1} parent=1 // loop_footer
      %s18 = sadd.s32 1, %s14
    $region7: #{tpu_custom_call.1} parent=1 // loop_footer_branch
      %13 = sbr.rel target = $region3
    $region8: #{tpu_custom_call.1} parent=1 // loop_exit
      _
    %1709 = vsyncpa [#allocation3], 1
    %s1710 = scalar_lea.sflag [#allocation3], 1
    %1711 = vsyncpa %s1710, 1

</llo_original>
